<compile_context>
chip_gen: v6e
topology: v6e:2x2x1
jax: 0.10.0
libtpu: 0.0.40
codegen_flags: <defaults>
</compile_context>

<pallas_src>
import functools

import jax
import jax.numpy as jnp
from jax import lax
from jax.experimental import pallas as pl
from jax.experimental.pallas import tpu as pltpu


def _encoder_kernel(x_ref,
                    w_ih_f_ref, w_ih_b_ref, w_hh_ref, b_ref,
                    w_head_ref, b_head_ref, noise_ref,
                    z_ref, mu_ref, sig_ref,
                    gxf_ref, gxb_ref,
                    *, seq_len, hidden_size, d_z):
    H = hidden_size
    T = seq_len
    Bb = x_ref.shape[1]          # batch block (multiple of 8 sublanes)
    G = 8 * H                    # fused gates: [i_f,i_b,f_f,f_b,g_f,g_b,o_f,o_b]

    # ---- Hoisted input projection (off the recurrent critical path).
    #      One big matmul per direction; fused (fwd+bwd) biases folded in.
    x2 = x_ref[...].reshape(T * Bb, x_ref.shape[2])                   # (T*Bb, 5)
    gxf_ref[...] = (jnp.dot(x2, w_ih_f_ref[...],
                            preferred_element_type=jnp.float32)
                    + b_ref[...])                                     # (T*Bb, 8H)
    gxb_ref[...] = jnp.dot(x2, w_ih_b_ref[...],
                           preferred_element_type=jnp.float32)        # (T*Bb, 8H)

    # ---- Loop-invariant values hoisted out of the recurrence.
    w_hh = w_hh_ref[...]                                              # (2H, 8H)
    lane = lax.broadcasted_iota(jnp.int32, (Bb, G), 1)
    g_mask = (lane >= 4 * H) & (lane < 6 * H)                         # tanh lanes

    def body(t, carry):
        h, c = carry                                                  # (Bb, 2H): [fwd|bwd]
        f_start = pl.multiple_of(t * Bb, 8)
        b_start = pl.multiple_of((T - 1 - t) * Bb, 8)
        gates = (gxf_ref[pl.ds(f_start, Bb), :]
                 + gxb_ref[pl.ds(b_start, Bb), :]
                 + jnp.dot(h, w_hh, preferred_element_type=jnp.float32))
        # Full-width nonlinearities, then one slice per gate.
        act = jnp.where(g_mask, jnp.tanh(gates), jax.nn.sigmoid(gates))
        i = act[:, 0 * H:2 * H]
        f = act[:, 2 * H:4 * H]
        g = act[:, 4 * H:6 * H]
        o = act[:, 6 * H:8 * H]
        c_new = f * c + i * g
        h_new = o * jnp.tanh(c_new)
        return h_new, c_new

    zeros = jnp.zeros((Bb, 2 * H), jnp.float32)
    h, _ = lax.fori_loop(0, T, body, (zeros, zeros), unroll=True)

    # h is already the [h_forward | h_backward] concat ('fb b h -> b (fb h)').
    heads = (jnp.dot(h, w_head_ref[...], preferred_element_type=jnp.float32)
             + b_head_ref[...])                                       # (Bb, 2*d_z)
    mu = heads[:, :d_z]
    sigma_hat = heads[:, d_z:]
    z = mu + jnp.exp(sigma_hat * 0.5) * noise_ref[...]

    z_ref[...] = z
    mu_ref[...] = mu
    sig_ref[...] = sigma_hat


def _interleave_gate_cols(wf, wb, hidden_size):
    """(r,4H),(r,4H) -> (r,8H) laid out [i_f,i_b,f_f,f_b,g_f,g_b,o_f,o_b]."""
    r = wf.shape[0]
    H = hidden_size
    stacked = jnp.stack([wf.reshape(r, 4, H), wb.reshape(r, 4, H)], axis=2)
    return stacked.reshape(r, 8 * H)


def encoder_rnn_forward(inputs, params, noise, *, batch_block=256):
    """inputs: (T, B, 5) time-major f32; noise: (B, d_z) ~ N(0,1).

    Returns (z, mu, sigma_hat), each (B, d_z).
    """
    inputs = inputs.astype(jnp.float32)
    noise = noise.astype(jnp.float32)
    T, B, in_sz = inputs.shape
    H = params["w_hh_f"].shape[0]
    d_z = params["w_mu"].shape[1]
    G = 8 * H

    zf = jnp.zeros_like(params["w_ih_f"])
    zh = jnp.zeros_like(params["w_hh_f"])
    # Expanded input-projection weights (other direction's columns zeroed).
    w_ih_f_exp = _interleave_gate_cols(params["w_ih_f"], zf, H)        # (5, 8H)
    w_ih_b_exp = _interleave_gate_cols(zf, params["w_ih_b"], H)        # (5, 8H)
    # Block-diagonal recurrent weight: both directions in one matmul.
    w_hh_fused = jnp.concatenate(
        [_interleave_gate_cols(params["w_hh_f"], zh, H),
         _interleave_gate_cols(zh, params["w_hh_b"], H)], axis=0)      # (2H, 8H)
    b_comb = _interleave_gate_cols(params["b_f"], params["b_b"], H)    # (1, 8H)
    # Fused mu/sigma heads.
    w_head = jnp.concatenate([params["w_mu"], params["w_sig"]], axis=1)
    b_head = jnp.concatenate([params["b_mu"], params["b_sig"]], axis=1)

    # Pad the batch to a multiple of 8 sublanes and tile it for the grid.
    B8 = ((B + 7) // 8) * 8
    B_blk = min(B8, batch_block)
    n_blk = -(-B8 // B_blk)
    B_pad = n_blk * B_blk
    if B_pad != B:
        inputs = jnp.pad(inputs, ((0, 0), (0, B_pad - B), (0, 0)))
        noise = jnp.pad(noise, ((0, B_pad - B), (0, 0)))

    kernel = functools.partial(_encoder_kernel, seq_len=T,
                               hidden_size=H, d_z=d_z)
    const2 = lambda b: (0, 0)

    in_specs = [
        pl.BlockSpec((T, B_blk, in_sz), lambda b: (0, b, 0)),          # x
        pl.BlockSpec((in_sz, G), const2),                              # w_ih fwd (expanded)
        pl.BlockSpec((in_sz, G), const2),                              # w_ih bwd (expanded)
        pl.BlockSpec((2 * H, G), const2),                              # w_hh block-diag
        pl.BlockSpec((1, G), const2),                                  # fused biases
        pl.BlockSpec((2 * H, 2 * d_z), const2),                        # fused head weight
        pl.BlockSpec((1, 2 * d_z), const2),                            # fused head bias
        pl.BlockSpec((B_blk, d_z), lambda b: (b, 0)),                  # noise
    ]
    out_spec = pl.BlockSpec((B_blk, d_z), lambda b: (b, 0))
    out_shape = tuple(jax.ShapeDtypeStruct((B_pad, d_z), jnp.float32)
                      for _ in range(3))

    z, mu, sigma_hat = pl.pallas_call(
        kernel,
        grid=(n_blk,),
        in_specs=in_specs,
        out_specs=(out_spec, out_spec, out_spec),
        out_shape=out_shape,
        scratch_shapes=[pltpu.VMEM((T * B_blk, G), jnp.float32),
                        pltpu.VMEM((T * B_blk, G), jnp.float32)],
        compiler_params=pltpu.CompilerParams(
            dimension_semantics=("parallel",)),
    )(inputs, w_ih_f_exp, w_ih_b_exp, w_hh_fused, b_comb, w_head, b_head, noise)
    return z[:B], mu[:B], sigma_hat[:B]


def _encoder_reference(x, params, noise):
    """Pure-JAX reference matching PyTorch EncoderRNN.forward (given the noise)."""
    T, B, _ = x.shape
    H = params["w_hh_f"].shape[0]

    def cell(x_t, h, c, w_ih, w_hh, b):
        gates = x_t @ w_ih + h @ w_hh + b
        i = jax.nn.sigmoid(gates[:, 0 * H:1 * H])
        f = jax.nn.sigmoid(gates[:, 1 * H:2 * H])
        g = jnp.tanh(gates[:, 2 * H:3 * H])
        o = jax.nn.sigmoid(gates[:, 3 * H:4 * H])
        c = f * c + i * g
        return o * jnp.tanh(c), c

    h_f = c_f = h_b = c_b = jnp.zeros((B, H), jnp.float32)
    for t in range(T):
        h_f, c_f = cell(x[t], h_f, c_f,
                        params["w_ih_f"], params["w_hh_f"], params["b_f"])
        h_b, c_b = cell(x[T - 1 - t], h_b, c_b,
                        params["w_ih_b"], params["w_hh_b"], params["b_b"])
    hidden = jnp.concatenate([h_f, h_b], axis=1)
    mu = hidden @ params["w_mu"] + params["b_mu"]
    sigma_hat = hidden @ params["w_sig"] + params["b_sig"]
    z = mu + jnp.exp(sigma_hat / 2.0) * noise
    return z, mu, sigma_hat


if __name__ == "__main__":
    d_z, H, B, T = 8, 32, 2, 8
    input_size = 5

    key = jax.random.PRNGKey(0)
    keys = jax.random.split(key, 16)
    stdv = 1.0 / jnp.sqrt(jnp.float32(H))

    def u(k, shape):
        return jax.random.uniform(k, shape, jnp.float32, -stdv, stdv)

    # PyTorch layouts: weight_ih (4H, 5), weight_hh (4H, H) — stored here
    # pre-transposed so the kernel does x @ W.  Biases b_ih + b_hh fused.
    params = dict(
        w_ih_f=u(keys[0], (input_size, 4 * H)),
        w_hh_f=u(keys[1], (H, 4 * H)),
        b_f=u(keys[2], (1, 4 * H)) + u(keys[3], (1, 4 * H)),
        w_ih_b=u(keys[4], (input_size, 4 * H)),
        w_hh_b=u(keys[5], (H, 4 * H)),
        b_b=u(keys[6], (1, 4 * H)) + u(keys[7], (1, 4 * H)),
        w_mu=u(keys[8], (2 * H, d_z)),
        b_mu=u(keys[9], (1, d_z)),
        w_sig=u(keys[10], (2 * H, d_z)),
        b_sig=u(keys[11], (1, d_z)),
    )

    x = jax.random.normal(keys[12], (T, B, input_size), jnp.float32)
    eps = jax.random.normal(keys[13], (B, d_z), jnp.float32)

    out = jax.jit(encoder_rnn_forward)(x, params, eps)
    jax.block_until_ready(out)
    z, mu, sigma_hat = out

    assert z.shape == (B, d_z) and mu.shape == (B, d_z) and sigma_hat.shape == (B, d_z)

    z_ref, mu_ref, sig_ref = _encoder_reference(x, params, eps)
    assert jnp.allclose(mu, mu_ref, atol=1e-2, rtol=1e-2)
    assert jnp.allclose(sigma_hat, sig_ref, atol=1e-2, rtol=1e-2)
    assert jnp.allclose(z, z_ref, atol=1e-2, rtol=1e-2)

    print("KERNEL_OK")
</pallas_src>

<mosaic_0001>
module attributes {stable_mosaic.version = 11 : i64} {
  func.func @_encoder_kernel(%arg0: i32, %arg1: memref<8x8x5xf32, #tpu.memory_space<vmem>>, %arg2: memref<5x256xf32, #tpu.memory_space<vmem>>, %arg3: memref<5x256xf32, #tpu.memory_space<vmem>>, %arg4: memref<64x256xf32, #tpu.memory_space<vmem>>, %arg5: memref<1x256xf32, #tpu.memory_space<vmem>>, %arg6: memref<64x16xf32, #tpu.memory_space<vmem>>, %arg7: memref<1x16xf32, #tpu.memory_space<vmem>>, %arg8: memref<8x8xf32, #tpu.memory_space<vmem>>, %arg9: memref<8x8xf32, #tpu.memory_space<vmem>>, %arg10: memref<8x8xf32, #tpu.memory_space<vmem>>, %arg11: memref<8x8xf32, #tpu.memory_space<vmem>>, %arg12: memref<64x256xf32, #tpu.memory_space<vmem>>, %arg13: memref<64x256xf32, #tpu.memory_space<vmem>>) attributes {dimension_semantics = [#tpu.dimension_semantics<parallel>], iteration_bounds = array<i64: 1>, scalar_prefetch = 0 : i64, scratch_operands = 2 : i64, tpu.core_type = #tpu.core_type<tc>, window_params = [{transform_indices = @transform_0, window_bounds = array<i64: 8, 8, 5>}, {pipeline_mode = #tpu.pipeline_mode<synchronous>, transform_indices = @transform_1, window_bounds = array<i64: 5, 256>}, {pipeline_mode = #tpu.pipeline_mode<synchronous>, transform_indices = @transform_2, window_bounds = array<i64: 5, 256>}, {pipeline_mode = #tpu.pipeline_mode<synchronous>, transform_indices = @transform_3, window_bounds = array<i64: 64, 256>}, {pipeline_mode = #tpu.pipeline_mode<synchronous>, transform_indices = @transform_4, window_bounds = array<i64: 1, 256>}, {pipeline_mode = #tpu.pipeline_mode<synchronous>, transform_indices = @transform_5, window_bounds = array<i64: 64, 16>}, {pipeline_mode = #tpu.pipeline_mode<synchronous>, transform_indices = @transform_6, window_bounds = array<i64: 1, 16>}, {transform_indices = @transform_7, window_bounds = array<i64: 8, 8>}, {transform_indices = @transform_8, window_bounds = array<i64: 8, 8>}, {transform_indices = @transform_9, window_bounds = array<i64: 8, 8>}, {transform_indices = @transform_10, window_bounds = array<i64: 8, 8>}]} {
    %c0 = arith.constant 0 : index
    %c0_0 = arith.constant 0 : index
    %c0_1 = arith.constant 0 : index
    %0 = vector.load %arg1[%c0, %c0_0, %c0_1] : memref<8x8x5xf32, #tpu.memory_space<vmem>>, vector<8x8x5xf32>
    %1 = vector.shape_cast %0 : vector<8x8x5xf32> to vector<64x5xf32>
    %c0_2 = arith.constant 0 : index
    %c0_3 = arith.constant 0 : index
    %2 = vector.load %arg2[%c0_2, %c0_3] : memref<5x256xf32, #tpu.memory_space<vmem>>, vector<5x256xf32>
    %cst = arith.constant dense<0.000000e+00> : vector<64x256xf32>
    %3 = tpu.matmul %1, %2, %cst {dimension_numbers = #tpu.dot_dimension_numbers<[1], [0], [0], [1], [0, 0, 1, 1], [], []>} : vector<64x5xf32>, vector<5x256xf32>, vector<64x256xf32> -> vector<64x256xf32>
    %c0_4 = arith.constant 0 : index
    %c0_5 = arith.constant 0 : index
    %4 = vector.load %arg5[%c0_4, %c0_5] : memref<1x256xf32, #tpu.memory_space<vmem>>, vector<1x256xf32>
    %5 = vector.broadcast %4 : vector<1x256xf32> to vector<64x256xf32>
    %6 = arith.addf %3, %5 : vector<64x256xf32>
    %c0_6 = arith.constant 0 : index
    %c0_7 = arith.constant 0 : index
    %7 = vector.load %arg12[%c0_6, %c0_7] : memref<64x256xf32, #tpu.memory_space<vmem>>, vector<64x256xf32>
    tpu.vector_store %arg12[%c0_6, %c0_7], %6 {strides = array<i32>} : memref<64x256xf32, #tpu.memory_space<vmem>>, vector<64x256xf32>,
    %c0_8 = arith.constant 0 : index
    %c0_9 = arith.constant 0 : index
    %8 = vector.load %arg3[%c0_8, %c0_9] : memref<5x256xf32, #tpu.memory_space<vmem>>, vector<5x256xf32>
    %cst_10 = arith.constant dense<0.000000e+00> : vector<64x256xf32>
    %9 = tpu.matmul %1, %8, %cst_10 {dimension_numbers = #tpu.dot_dimension_numbers<[1], [0], [0], [1], [0, 0, 1, 1], [], []>} : vector<64x5xf32>, vector<5x256xf32>, vector<64x256xf32> -> vector<64x256xf32>
    %c0_11 = arith.constant 0 : index
    %c0_12 = arith.constant 0 : index
    %10 = vector.load %arg13[%c0_11, %c0_12] : memref<64x256xf32, #tpu.memory_space<vmem>>, vector<64x256xf32>
    tpu.vector_store %arg13[%c0_11, %c0_12], %9 {strides = array<i32>} : memref<64x256xf32, #tpu.memory_space<vmem>>, vector<64x256xf32>,
    %c0_13 = arith.constant 0 : index
    %c0_14 = arith.constant 0 : index
    %11 = vector.load %arg4[%c0_13, %c0_14] : memref<64x256xf32, #tpu.memory_space<vmem>>, vector<64x256xf32>
    %12 = tpu.iota {dimensions = array<i32: 1>} : vector<8x256xi32>
    %c128_i32 = arith.constant 128 : i32
    %13 = vector.broadcast %c128_i32 : i32 to vector<8x256xi32>
    %14 = arith.cmpi sge, %12, %13 : vector<8x256xi32>
    %c192_i32 = arith.constant 192 : i32
    %15 = vector.broadcast %c192_i32 : i32 to vector<8x256xi32>
    %16 = arith.cmpi slt, %12, %15 : vector<8x256xi32>
    %17 = arith.andi %14, %16 : vector<8x256xi1>
    %cst_15 = arith.constant 0.000000e+00 : f32
    %18 = vector.broadcast %cst_15 : f32 to vector<8x64xf32>
    %c0_i32 = arith.constant 0 : i32
    %c8_i32 = arith.constant 8 : i32
    %19 = arith.muli %c0_i32, %c8_i32 : i32
    %20 = tpu.assume_multiple %19, 8 : i32
    %c7_i32 = arith.constant 7 : i32
    %21 = arith.subi %c7_i32, %c0_i32 : i32
    %c8_i32_16 = arith.constant 8 : i32
    %22 = arith.muli %21, %c8_i32_16 : i32
    %23 = tpu.assume_multiple %22, 8 : i32
    %24 = arith.index_cast %20 : i32 to index
    %c0_17 = arith.constant 0 : index
    %25 = vector.load %arg12[%24, %c0_17] : memref<64x256xf32, #tpu.memory_space<vmem>>, vector<8x256xf32>
    %26 = arith.index_cast %23 : i32 to index
    %c0_18 = arith.constant 0 : index
    %27 = vector.load %arg13[%26, %c0_18] : memref<64x256xf32, #tpu.memory_space<vmem>>, vector<8x256xf32>
    %28 = arith.addf %25, %27 : vector<8x256xf32>
    %cst_19 = arith.constant dense<0.000000e+00> : vector<8x256xf32>
    %29 = tpu.matmul %18, %11, %cst_19 {dimension_numbers = #tpu.dot_dimension_numbers<[1], [0], [0], [1], [0, 0, 1, 1], [], []>} : vector<8x64xf32>, vector<64x256xf32>, vector<8x256xf32> -> vector<8x256xf32>
    %30 = arith.addf %28, %29 : vector<8x256xf32>
    %31 = math.tanh %30 : vector<8x256xf32>
    %32 = arith.negf %30 : vector<8x256xf32>
    %33 = math.exp %32 : vector<8x256xf32>
    %cst_20 = arith.constant 1.000000e+00 : f32
    %34 = vector.broadcast %cst_20 : f32 to vector<8x256xf32>
    %35 = arith.addf %34, %33 : vector<8x256xf32>
    %36 = arith.divf %34, %35 : vector<8x256xf32>
    %37 = arith.select %17, %31, %36 : vector<8x256xi1>, vector<8x256xf32>
    %38 = vector.extract_strided_slice %37 {offsets = [0, 0], sizes = [8, 64], strides = [1, 1]} : vector<8x256xf32> to vector<8x64xf32>
    %39 = vector.extract_strided_slice %37 {offsets = [0, 64], sizes = [8, 64], strides = [1, 1]} : vector<8x256xf32> to vector<8x64xf32>
    %40 = vector.extract_strided_slice %37 {offsets = [0, 128], sizes = [8, 64], strides = [1, 1]} : vector<8x256xf32> to vector<8x64xf32>
    %41 = vector.extract_strided_slice %37 {offsets = [0, 192], sizes = [8, 64], strides = [1, 1]} : vector<8x256xf32> to vector<8x64xf32>
    %42 = arith.mulf %39, %18 : vector<8x64xf32>
    %43 = arith.mulf %38, %40 : vector<8x64xf32>
    %44 = arith.addf %42, %43 : vector<8x64xf32>
    %45 = math.tanh %44 : vector<8x64xf32>
    %46 = arith.mulf %41, %45 : vector<8x64xf32>
    %c1_i32 = arith.constant 1 : i32
    %c8_i32_21 = arith.constant 8 : i32
    %47 = arith.muli %c1_i32, %c8_i32_21 : i32
    %48 = tpu.assume_multiple %47, 8 : i32
    %c7_i32_22 = arith.constant 7 : i32
    %49 = arith.subi %c7_i32_22, %c1_i32 : i32
    %c8_i32_23 = arith.constant 8 : i32
    %50 = arith.muli %49, %c8_i32_23 : i32
    %51 = tpu.assume_multiple %50, 8 : i32
    %52 = arith.index_cast %48 : i32 to index
    %c0_24 = arith.constant 0 : index
    %53 = vector.load %arg12[%52, %c0_24] : memref<64x256xf32, #tpu.memory_space<vmem>>, vector<8x256xf32>
    %54 = arith.index_cast %51 : i32 to index
    %c0_25 = arith.constant 0 : index
    %55 = vector.load %arg13[%54, %c0_25] : memref<64x256xf32, #tpu.memory_space<vmem>>, vector<8x256xf32>
    %56 = arith.addf %53, %55 : vector<8x256xf32>
    %cst_26 = arith.constant dense<0.000000e+00> : vector<8x256xf32>
    %57 = tpu.matmul %46, %11, %cst_26 {dimension_numbers = #tpu.dot_dimension_numbers<[1], [0], [0], [1], [0, 0, 1, 1], [], []>} : vector<8x64xf32>, vector<64x256xf32>, vector<8x256xf32> -> vector<8x256xf32>
    %58 = arith.addf %56, %57 : vector<8x256xf32>
    %59 = math.tanh %58 : vector<8x256xf32>
    %60 = arith.negf %58 : vector<8x256xf32>
    %61 = math.exp %60 : vector<8x256xf32>
    %cst_27 = arith.constant 1.000000e+00 : f32
    %62 = vector.broadcast %cst_27 : f32 to vector<8x256xf32>
    %63 = arith.addf %62, %61 : vector<8x256xf32>
    %64 = arith.divf %62, %63 : vector<8x256xf32>
    %65 = arith.select %17, %59, %64 : vector<8x256xi1>, vector<8x256xf32>
    %66 = vector.extract_strided_slice %65 {offsets = [0, 0], sizes = [8, 64], strides = [1, 1]} : vector<8x256xf32> to vector<8x64xf32>
    %67 = vector.extract_strided_slice %65 {offsets = [0, 64], sizes = [8, 64], strides = [1, 1]} : vector<8x256xf32> to vector<8x64xf32>
    %68 = vector.extract_strided_slice %65 {offsets = [0, 128], sizes = [8, 64], strides = [1, 1]} : vector<8x256xf32> to vector<8x64xf32>
    %69 = vector.extract_strided_slice %65 {offsets = [0, 192], sizes = [8, 64], strides = [1, 1]} : vector<8x256xf32> to vector<8x64xf32>
    %70 = arith.mulf %67, %44 : vector<8x64xf32>
    %71 = arith.mulf %66, %68 : vector<8x64xf32>
    %72 = arith.addf %70, %71 : vector<8x64xf32>
    %73 = math.tanh %72 : vector<8x64xf32>
    %74 = arith.mulf %69, %73 : vector<8x64xf32>
    %c2_i32 = arith.constant 2 : i32
    %c8_i32_28 = arith.constant 8 : i32
    %75 = arith.muli %c2_i32, %c8_i32_28 : i32
    %76 = tpu.assume_multiple %75, 8 : i32
    %c7_i32_29 = arith.constant 7 : i32
    %77 = arith.subi %c7_i32_29, %c2_i32 : i32
    %c8_i32_30 = arith.constant 8 : i32
    %78 = arith.muli %77, %c8_i32_30 : i32
    %79 = tpu.assume_multiple %78, 8 : i32
    %80 = arith.index_cast %76 : i32 to index
    %c0_31 = arith.constant 0 : index
    %81 = vector.load %arg12[%80, %c0_31] : memref<64x256xf32, #tpu.memory_space<vmem>>, vector<8x256xf32>
    %82 = arith.index_cast %79 : i32 to index
    %c0_32 = arith.constant 0 : index
    %83 = vector.load %arg13[%82, %c0_32] : memref<64x256xf32, #tpu.memory_space<vmem>>, vector<8x256xf32>
    %84 = arith.addf %81, %83 : vector<8x256xf32>
    %cst_33 = arith.constant dense<0.000000e+00> : vector<8x256xf32>
    %85 = tpu.matmul %74, %11, %cst_33 {dimension_numbers = #tpu.dot_dimension_numbers<[1], [0], [0], [1], [0, 0, 1, 1], [], []>} : vector<8x64xf32>, vector<64x256xf32>, vector<8x256xf32> -> vector<8x256xf32>
    %86 = arith.addf %84, %85 : vector<8x256xf32>
    %87 = math.tanh %86 : vector<8x256xf32>
    %88 = arith.negf %86 : vector<8x256xf32>
    %89 = math.exp %88 : vector<8x256xf32>
    %cst_34 = arith.constant 1.000000e+00 : f32
    %90 = vector.broadcast %cst_34 : f32 to vector<8x256xf32>
    %91 = arith.addf %90, %89 : vector<8x256xf32>
    %92 = arith.divf %90, %91 : vector<8x256xf32>
    %93 = arith.select %17, %87, %92 : vector<8x256xi1>, vector<8x256xf32>
    %94 = vector.extract_strided_slice %93 {offsets = [0, 0], sizes = [8, 64], strides = [1, 1]} : vector<8x256xf32> to vector<8x64xf32>
    %95 = vector.extract_strided_slice %93 {offsets = [0, 64], sizes = [8, 64], strides = [1, 1]} : vector<8x256xf32> to vector<8x64xf32>
    %96 = vector.extract_strided_slice %93 {offsets = [0, 128], sizes = [8, 64], strides = [1, 1]} : vector<8x256xf32> to vector<8x64xf32>
    %97 = vector.extract_strided_slice %93 {offsets = [0, 192], sizes = [8, 64], strides = [1, 1]} : vector<8x256xf32> to vector<8x64xf32>
    %98 = arith.mulf %95, %72 : vector<8x64xf32>
    %99 = arith.mulf %94, %96 : vector<8x64xf32>
    %100 = arith.addf %98, %99 : vector<8x64xf32>
    %101 = math.tanh %100 : vector<8x64xf32>
    %102 = arith.mulf %97, %101 : vector<8x64xf32>
    %c3_i32 = arith.constant 3 : i32
    %c8_i32_35 = arith.constant 8 : i32
    %103 = arith.muli %c3_i32, %c8_i32_35 : i32
    %104 = tpu.assume_multiple %103, 8 : i32
    %c7_i32_36 = arith.constant 7 : i32
    %105 = arith.subi %c7_i32_36, %c3_i32 : i32
    %c8_i32_37 = arith.constant 8 : i32
    %106 = arith.muli %105, %c8_i32_37 : i32
    %107 = tpu.assume_multiple %106, 8 : i32
    %108 = arith.index_cast %104 : i32 to index
    %c0_38 = arith.constant 0 : index
    %109 = vector.load %arg12[%108, %c0_38] : memref<64x256xf32, #tpu.memory_space<vmem>>, vector<8x256xf32>
    %110 = arith.index_cast %107 : i32 to index
    %c0_39 = arith.constant 0 : index
    %111 = vector.load %arg13[%110, %c0_39] : memref<64x256xf32, #tpu.memory_space<vmem>>, vector<8x256xf32>
    %112 = arith.addf %109, %111 : vector<8x256xf32>
    %cst_40 = arith.constant dense<0.000000e+00> : vector<8x256xf32>
    %113 = tpu.matmul %102, %11, %cst_40 {dimension_numbers = #tpu.dot_dimension_numbers<[1], [0], [0], [1], [0, 0, 1, 1], [], []>} : vector<8x64xf32>, vector<64x256xf32>, vector<8x256xf32> -> vector<8x256xf32>
    %114 = arith.addf %112, %113 : vector<8x256xf32>
    %115 = math.tanh %114 : vector<8x256xf32>
    %116 = arith.negf %114 : vector<8x256xf32>
    %117 = math.exp %116 : vector<8x256xf32>
    %cst_41 = arith.constant 1.000000e+00 : f32
    %118 = vector.broadcast %cst_41 : f32 to vector<8x256xf32>
    %119 = arith.addf %118, %117 : vector<8x256xf32>
    %120 = arith.divf %118, %119 : vector<8x256xf32>
    %121 = arith.select %17, %115, %120 : vector<8x256xi1>, vector<8x256xf32>
    %122 = vector.extract_strided_slice %121 {offsets = [0, 0], sizes = [8, 64], strides = [1, 1]} : vector<8x256xf32> to vector<8x64xf32>
    %123 = vector.extract_strided_slice %121 {offsets = [0, 64], sizes = [8, 64], strides = [1, 1]} : vector<8x256xf32> to vector<8x64xf32>
    %124 = vector.extract_strided_slice %121 {offsets = [0, 128], sizes = [8, 64], strides = [1, 1]} : vector<8x256xf32> to vector<8x64xf32>
    %125 = vector.extract_strided_slice %121 {offsets = [0, 192], sizes = [8, 64], strides = [1, 1]} : vector<8x256xf32> to vector<8x64xf32>
    %126 = arith.mulf %123, %100 : vector<8x64xf32>
    %127 = arith.mulf %122, %124 : vector<8x64xf32>
    %128 = arith.addf %126, %127 : vector<8x64xf32>
    %129 = math.tanh %128 : vector<8x64xf32>
    %130 = arith.mulf %125, %129 : vector<8x64xf32>
    %c4_i32 = arith.constant 4 : i32
    %c8_i32_42 = arith.constant 8 : i32
    %131 = arith.muli %c4_i32, %c8_i32_42 : i32
    %132 = tpu.assume_multiple %131, 8 : i32
    %c7_i32_43 = arith.constant 7 : i32
    %133 = arith.subi %c7_i32_43, %c4_i32 : i32
    %c8_i32_44 = arith.constant 8 : i32
    %134 = arith.muli %133, %c8_i32_44 : i32
    %135 = tpu.assume_multiple %134, 8 : i32
    %136 = arith.index_cast %132 : i32 to index
    %c0_45 = arith.constant 0 : index
    %137 = vector.load %arg12[%136, %c0_45] : memref<64x256xf32, #tpu.memory_space<vmem>>, vector<8x256xf32>
    %138 = arith.index_cast %135 : i32 to index
    %c0_46 = arith.constant 0 : index
    %139 = vector.load %arg13[%138, %c0_46] : memref<64x256xf32, #tpu.memory_space<vmem>>, vector<8x256xf32>
    %140 = arith.addf %137, %139 : vector<8x256xf32>
    %cst_47 = arith.constant dense<0.000000e+00> : vector<8x256xf32>
    %141 = tpu.matmul %130, %11, %cst_47 {dimension_numbers = #tpu.dot_dimension_numbers<[1], [0], [0], [1], [0, 0, 1, 1], [], []>} : vector<8x64xf32>, vector<64x256xf32>, vector<8x256xf32> -> vector<8x256xf32>
    %142 = arith.addf %140, %141 : vector<8x256xf32>
    %143 = math.tanh %142 : vector<8x256xf32>
    %144 = arith.negf %142 : vector<8x256xf32>
    %145 = math.exp %144 : vector<8x256xf32>
    %cst_48 = arith.constant 1.000000e+00 : f32
    %146 = vector.broadcast %cst_48 : f32 to vector<8x256xf32>
    %147 = arith.addf %146, %145 : vector<8x256xf32>
    %148 = arith.divf %146, %147 : vector<8x256xf32>
    %149 = arith.select %17, %143, %148 : vector<8x256xi1>, vector<8x256xf32>
    %150 = vector.extract_strided_slice %149 {offsets = [0, 0], sizes = [8, 64], strides = [1, 1]} : vector<8x256xf32> to vector<8x64xf32>
    %151 = vector.extract_strided_slice %149 {offsets = [0, 64], sizes = [8, 64], strides = [1, 1]} : vector<8x256xf32> to vector<8x64xf32>
    %152 = vector.extract_strided_slice %149 {offsets = [0, 128], sizes = [8, 64], strides = [1, 1]} : vector<8x256xf32> to vector<8x64xf32>
    %153 = vector.extract_strided_slice %149 {offsets = [0, 192], sizes = [8, 64], strides = [1, 1]} : vector<8x256xf32> to vector<8x64xf32>
    %154 = arith.mulf %151, %128 : vector<8x64xf32>
    %155 = arith.mulf %150, %152 : vector<8x64xf32>
    %156 = arith.addf %154, %155 : vector<8x64xf32>
    %157 = math.tanh %156 : vector<8x64xf32>
    %158 = arith.mulf %153, %157 : vector<8x64xf32>
    %c5_i32 = arith.constant 5 : i32
    %c8_i32_49 = arith.constant 8 : i32
    %159 = arith.muli %c5_i32, %c8_i32_49 : i32
    %160 = tpu.assume_multiple %159, 8 : i32
    %c7_i32_50 = arith.constant 7 : i32
    %161 = arith.subi %c7_i32_50, %c5_i32 : i32
    %c8_i32_51 = arith.constant 8 : i32
    %162 = arith.muli %161, %c8_i32_51 : i32
    %163 = tpu.assume_multiple %162, 8 : i32
    %164 = arith.index_cast %160 : i32 to index
    %c0_52 = arith.constant 0 : index
    %165 = vector.load %arg12[%164, %c0_52] : memref<64x256xf32, #tpu.memory_space<vmem>>, vector<8x256xf32>
    %166 = arith.index_cast %163 : i32 to index
    %c0_53 = arith.constant 0 : index
    %167 = vector.load %arg13[%166, %c0_53] : memref<64x256xf32, #tpu.memory_space<vmem>>, vector<8x256xf32>
    %168 = arith.addf %165, %167 : vector<8x256xf32>
    %cst_54 = arith.constant dense<0.000000e+00> : vector<8x256xf32>
    %169 = tpu.matmul %158, %11, %cst_54 {dimension_numbers = #tpu.dot_dimension_numbers<[1], [0], [0], [1], [0, 0, 1, 1], [], []>} : vector<8x64xf32>, vector<64x256xf32>, vector<8x256xf32> -> vector<8x256xf32>
    %170 = arith.addf %168, %169 : vector<8x256xf32>
    %171 = math.tanh %170 : vector<8x256xf32>
    %172 = arith.negf %170 : vector<8x256xf32>
    %173 = math.exp %172 : vector<8x256xf32>
    %cst_55 = arith.constant 1.000000e+00 : f32
    %174 = vector.broadcast %cst_55 : f32 to vector<8x256xf32>
    %175 = arith.addf %174, %173 : vector<8x256xf32>
    %176 = arith.divf %174, %175 : vector<8x256xf32>
    %177 = arith.select %17, %171, %176 : vector<8x256xi1>, vector<8x256xf32>
    %178 = vector.extract_strided_slice %177 {offsets = [0, 0], sizes = [8, 64], strides = [1, 1]} : vector<8x256xf32> to vector<8x64xf32>
    %179 = vector.extract_strided_slice %177 {offsets = [0, 64], sizes = [8, 64], strides = [1, 1]} : vector<8x256xf32> to vector<8x64xf32>
    %180 = vector.extract_strided_slice %177 {offsets = [0, 128], sizes = [8, 64], strides = [1, 1]} : vector<8x256xf32> to vector<8x64xf32>
    %181 = vector.extract_strided_slice %177 {offsets = [0, 192], sizes = [8, 64], strides = [1, 1]} : vector<8x256xf32> to vector<8x64xf32>
    %182 = arith.mulf %179, %156 : vector<8x64xf32>
    %183 = arith.mulf %178, %180 : vector<8x64xf32>
    %184 = arith.addf %182, %183 : vector<8x64xf32>
    %185 = math.tanh %184 : vector<8x64xf32>
    %186 = arith.mulf %181, %185 : vector<8x64xf32>
    %c6_i32 = arith.constant 6 : i32
    %c8_i32_56 = arith.constant 8 : i32
    %187 = arith.muli %c6_i32, %c8_i32_56 : i32
    %188 = tpu.assume_multiple %187, 8 : i32
    %c7_i32_57 = arith.constant 7 : i32
    %189 = arith.subi %c7_i32_57, %c6_i32 : i32
    %c8_i32_58 = arith.constant 8 : i32
    %190 = arith.muli %189, %c8_i32_58 : i32
    %191 = tpu.assume_multiple %190, 8 : i32
    %192 = arith.index_cast %188 : i32 to index
    %c0_59 = arith.constant 0 : index
    %193 = vector.load %arg12[%192, %c0_59] : memref<64x256xf32, #tpu.memory_space<vmem>>, vector<8x256xf32>
    %194 = arith.index_cast %191 : i32 to index
    %c0_60 = arith.constant 0 : index
    %195 = vector.load %arg13[%194, %c0_60] : memref<64x256xf32, #tpu.memory_space<vmem>>, vector<8x256xf32>
    %196 = arith.addf %193, %195 : vector<8x256xf32>
    %cst_61 = arith.constant dense<0.000000e+00> : vector<8x256xf32>
    %197 = tpu.matmul %186, %11, %cst_61 {dimension_numbers = #tpu.dot_dimension_numbers<[1], [0], [0], [1], [0, 0, 1, 1], [], []>} : vector<8x64xf32>, vector<64x256xf32>, vector<8x256xf32> -> vector<8x256xf32>
    %198 = arith.addf %196, %197 : vector<8x256xf32>
    %199 = math.tanh %198 : vector<8x256xf32>
    %200 = arith.negf %198 : vector<8x256xf32>
    %201 = math.exp %200 : vector<8x256xf32>
    %cst_62 = arith.constant 1.000000e+00 : f32
    %202 = vector.broadcast %cst_62 : f32 to vector<8x256xf32>
    %203 = arith.addf %202, %201 : vector<8x256xf32>
    %204 = arith.divf %202, %203 : vector<8x256xf32>
    %205 = arith.select %17, %199, %204 : vector<8x256xi1>, vector<8x256xf32>
    %206 = vector.extract_strided_slice %205 {offsets = [0, 0], sizes = [8, 64], strides = [1, 1]} : vector<8x256xf32> to vector<8x64xf32>
    %207 = vector.extract_strided_slice %205 {offsets = [0, 64], sizes = [8, 64], strides = [1, 1]} : vector<8x256xf32> to vector<8x64xf32>
    %208 = vector.extract_strided_slice %205 {offsets = [0, 128], sizes = [8, 64], strides = [1, 1]} : vector<8x256xf32> to vector<8x64xf32>
    %209 = vector.extract_strided_slice %205 {offsets = [0, 192], sizes = [8, 64], strides = [1, 1]} : vector<8x256xf32> to vector<8x64xf32>
    %210 = arith.mulf %207, %184 : vector<8x64xf32>
    %211 = arith.mulf %206, %208 : vector<8x64xf32>
    %212 = arith.addf %210, %211 : vector<8x64xf32>
    %213 = math.tanh %212 : vector<8x64xf32>
    %214 = arith.mulf %209, %213 : vector<8x64xf32>
    %c7_i32_63 = arith.constant 7 : i32
    %c8_i32_64 = arith.constant 8 : i32
    %215 = arith.muli %c7_i32_63, %c8_i32_64 : i32
    %216 = tpu.assume_multiple %215, 8 : i32
    %c7_i32_65 = arith.constant 7 : i32
    %217 = arith.subi %c7_i32_65, %c7_i32_63 : i32
    %c8_i32_66 = arith.constant 8 : i32
    %218 = arith.muli %217, %c8_i32_66 : i32
    %219 = tpu.assume_multiple %218, 8 : i32
    %220 = arith.index_cast %216 : i32 to index
    %c0_67 = arith.constant 0 : index
    %221 = vector.load %arg12[%220, %c0_67] : memref<64x256xf32, #tpu.memory_space<vmem>>, vector<8x256xf32>
    %222 = arith.index_cast %219 : i32 to index
    %c0_68 = arith.constant 0 : index
    %223 = vector.load %arg13[%222, %c0_68] : memref<64x256xf32, #tpu.memory_space<vmem>>, vector<8x256xf32>
    %224 = arith.addf %221, %223 : vector<8x256xf32>
    %cst_69 = arith.constant dense<0.000000e+00> : vector<8x256xf32>
    %225 = tpu.matmul %214, %11, %cst_69 {dimension_numbers = #tpu.dot_dimension_numbers<[1], [0], [0], [1], [0, 0, 1, 1], [], []>} : vector<8x64xf32>, vector<64x256xf32>, vector<8x256xf32> -> vector<8x256xf32>
    %226 = arith.addf %224, %225 : vector<8x256xf32>
    %227 = math.tanh %226 : vector<8x256xf32>
    %228 = arith.negf %226 : vector<8x256xf32>
    %229 = math.exp %228 : vector<8x256xf32>
    %cst_70 = arith.constant 1.000000e+00 : f32
    %230 = vector.broadcast %cst_70 : f32 to vector<8x256xf32>
    %231 = arith.addf %230, %229 : vector<8x256xf32>
    %232 = arith.divf %230, %231 : vector<8x256xf32>
    %233 = arith.select %17, %227, %232 : vector<8x256xi1>, vector<8x256xf32>
    %234 = vector.extract_strided_slice %233 {offsets = [0, 0], sizes = [8, 64], strides = [1, 1]} : vector<8x256xf32> to vector<8x64xf32>
    %235 = vector.extract_strided_slice %233 {offsets = [0, 64], sizes = [8, 64], strides = [1, 1]} : vector<8x256xf32> to vector<8x64xf32>
    %236 = vector.extract_strided_slice %233 {offsets = [0, 128], sizes = [8, 64], strides = [1, 1]} : vector<8x256xf32> to vector<8x64xf32>
    %237 = vector.extract_strided_slice %233 {offsets = [0, 192], sizes = [8, 64], strides = [1, 1]} : vector<8x256xf32> to vector<8x64xf32>
    %238 = arith.mulf %235, %212 : vector<8x64xf32>
    %239 = arith.mulf %234, %236 : vector<8x64xf32>
    %240 = arith.addf %238, %239 : vector<8x64xf32>
    %241 = math.tanh %240 : vector<8x64xf32>
    %242 = arith.mulf %237, %241 : vector<8x64xf32>
    %c8_i32_71 = arith.constant 8 : i32
    %c0_72 = arith.constant 0 : index
    %c0_73 = arith.constant 0 : index
    %243 = vector.load %arg6[%c0_72, %c0_73] : memref<64x16xf32, #tpu.memory_space<vmem>>, vector<64x16xf32>
    %cst_74 = arith.constant dense<0.000000e+00> : vector<8x16xf32>
    %244 = tpu.matmul %242, %243, %cst_74 {dimension_numbers = #tpu.dot_dimension_numbers<[1], [0], [0], [1], [0, 0, 1, 1], [], []>} : vector<8x64xf32>, vector<64x16xf32>, vector<8x16xf32> -> vector<8x16xf32>
    %c0_75 = arith.constant 0 : index
    %c0_76 = arith.constant 0 : index
    %245 = vector.load %arg7[%c0_75, %c0_76] : memref<1x16xf32, #tpu.memory_space<vmem>>, vector<1x16xf32>
    %246 = vector.broadcast %245 : vector<1x16xf32> to vector<8x16xf32>
    %247 = arith.addf %244, %246 : vector<8x16xf32>
    %248 = vector.extract_strided_slice %247 {offsets = [0, 0], sizes = [8, 8], strides = [1, 1]} : vector<8x16xf32> to vector<8x8xf32>
    %249 = vector.extract_strided_slice %247 {offsets = [0, 8], sizes = [8, 8], strides = [1, 1]} : vector<8x16xf32> to vector<8x8xf32>
    %cst_77 = arith.constant 5.000000e-01 : f32
    %250 = vector.broadcast %cst_77 : f32 to vector<8x8xf32>
    %251 = arith.mulf %249, %250 : vector<8x8xf32>
    %252 = math.exp %251 : vector<8x8xf32>
    %c0_78 = arith.constant 0 : index
    %c0_79 = arith.constant 0 : index
    %253 = vector.load %arg8[%c0_78, %c0_79] : memref<8x8xf32, #tpu.memory_space<vmem>>, vector<8x8xf32>
    %254 = arith.mulf %252, %253 : vector<8x8xf32>
    %255 = arith.addf %248, %254 : vector<8x8xf32>
    %c0_80 = arith.constant 0 : index
    %c0_81 = arith.constant 0 : index
    %256 = vector.load %arg9[%c0_80, %c0_81] : memref<8x8xf32, #tpu.memory_space<vmem>>, vector<8x8xf32>
    tpu.vector_store %arg9[%c0_80, %c0_81], %255 {strides = array<i32>} : memref<8x8xf32, #tpu.memory_space<vmem>>, vector<8x8xf32>,
    %c0_82 = arith.constant 0 : index
    %c0_83 = arith.constant 0 : index
    %257 = vector.load %arg10[%c0_82, %c0_83] : memref<8x8xf32, #tpu.memory_space<vmem>>, vector<8x8xf32>
    tpu.vector_store %arg10[%c0_82, %c0_83], %248 {strides = array<i32>} : memref<8x8xf32, #tpu.memory_space<vmem>>, vector<8x8xf32>,
    %c0_84 = arith.constant 0 : index
    %c0_85 = arith.constant 0 : index
    %258 = vector.load %arg11[%c0_84, %c0_85] : memref<8x8xf32, #tpu.memory_space<vmem>>, vector<8x8xf32>
    tpu.vector_store %arg11[%c0_84, %c0_85], %249 {strides = array<i32>} : memref<8x8xf32, #tpu.memory_space<vmem>>, vector<8x8xf32>,
    return
  }
  func.func @transform_0(%arg0: i32) -> (i32, i32, i32) {
    %c0_i32 = arith.constant 0 : i32
    %c0_i32_0 = arith.constant 0 : i32
    %c0_i32_1 = arith.constant 0 : i32
    return %c0_i32, %arg0, %c0_i32_0 : i32, i32, i32
  }
  func.func @transform_1(%arg0: i32) -> (i32, i32) {
    %c0_i32 = arith.constant 0 : i32
    %c0_i32_0 = arith.constant 0 : i32
    %c0_i32_1 = arith.constant 0 : i32
    return %c0_i32, %c0_i32_0 : i32, i32
  }
  func.func @transform_2(%arg0: i32) -> (i32, i32) {
    %c0_i32 = arith.constant 0 : i32
    %c0_i32_0 = arith.constant 0 : i32
    %c0_i32_1 = arith.constant 0 : i32
    return %c0_i32, %c0_i32_0 : i32, i32
  }
  func.func @transform_3(%arg0: i32) -> (i32, i32) {
    %c0_i32 = arith.constant 0 : i32
    %c0_i32_0 = arith.constant 0 : i32
    %c0_i32_1 = arith.constant 0 : i32
    return %c0_i32, %c0_i32_0 : i32, i32
  }
  func.func @transform_4(%arg0: i32) -> (i32, i32) {
    %c0_i32 = arith.constant 0 : i32
    %c0_i32_0 = arith.constant 0 : i32
    %c0_i32_1 = arith.constant 0 : i32
    return %c0_i32, %c0_i32_0 : i32, i32
  }
  func.func @transform_5(%arg0: i32) -> (i32, i32) {
    %c0_i32 = arith.constant 0 : i32
    %c0_i32_0 = arith.constant 0 : i32
    %c0_i32_1 = arith.constant 0 : i32
    return %c0_i32, %c0_i32_0 : i32, i32
  }
  func.func @transform_6(%arg0: i32) -> (i32, i32) {
    %c0_i32 = arith.constant 0 : i32
    %c0_i32_0 = arith.constant 0 : i32
    %c0_i32_1 = arith.constant 0 : i32
    return %c0_i32, %c0_i32_0 : i32, i32
  }
  func.func @transform_7(%arg0: i32) -> (i32, i32) {
    %c0_i32 = arith.constant 0 : i32
    %c0_i32_0 = arith.constant 0 : i32
    return %arg0, %c0_i32 : i32, i32
  }
  func.func @transform_8(%arg0: i32) -> (i32, i32) {
    %c0_i32 = arith.constant 0 : i32
    %c0_i32_0 = arith.constant 0 : i32
    return %arg0, %c0_i32 : i32, i32
  }
  func.func @transform_9(%arg0: i32) -> (i32, i32) {
    %c0_i32 = arith.constant 0 : i32
    %c0_i32_0 = arith.constant 0 : i32
    return %arg0, %c0_i32 : i32, i32
  }
  func.func @transform_10(%arg0: i32) -> (i32, i32) {
    %c0_i32 = arith.constant 0 : i32
    %c0_i32_0 = arith.constant 0 : i32
    return %arg0, %c0_i32 : i32, i32
  }
}

</mosaic_0001>

<llo_original>
// kernel: encoder_rnn_forward.1
$region0: #{encoder_rnn_forward.1}
  #allocation0 [shape = 'u32[]', space=smem, size = 0x4, offset = 0x4, fixed_abs, tag = 'smem constant byte address 0x4 - core index']
  #allocation1 [shape = 'u32[144,128]{1,0:T(1,128)}', space=vmem, size = 0x12000, scoped, tag = 'internal scratch']
  #allocation2 [shape = 'f32[64,256]{1,0:T(8,128)}', space=vmem, size = 0x10000, scoped, tag = 'scratch operand']
  #allocation3 [shape = 'f32[64,256]{1,0:T(8,128)}', space=vmem, size = 0x10000, scoped, tag = 'scratch operand']
  %s0 = inlined_call_operand.vmem [shape: f32[8,8,5], index: 0, kind: input, shape index: {}]
  %s1 = inlined_call_operand.vmem [shape: f32[5,256], index: 1, kind: input, shape index: {}]
  %s2 = inlined_call_operand.vmem [shape: f32[5,256], index: 2, kind: input, shape index: {}]
  %s3 = inlined_call_operand.vmem [shape: f32[64,256], index: 3, kind: input, shape index: {}]
  %s4 = inlined_call_operand.vmem [shape: f32[1,256], index: 4, kind: input, shape index: {}]
  %s5 = inlined_call_operand.vmem [shape: f32[64,16], index: 5, kind: input, shape index: {}]
  %s6 = inlined_call_operand.vmem [shape: f32[1,16], index: 6, kind: input, shape index: {}]
  %s7 = inlined_call_operand.vmem [shape: f32[8,8], index: 7, kind: input, shape index: {}]
  %s8 = inlined_call_operand.vmem [shape: f32[8,8], index: 8, kind: output, shape index: {0}]
  %s9 = inlined_call_operand.vmem [shape: f32[8,8], index: 9, kind: output, shape index: {1}]
  %s10 = inlined_call_operand.vmem [shape: f32[8,8], index: 10, kind: output, shape index: {2}]
  %11 = xla_tuple %s8, %s9, %s10
  %s12 = sld [smem:[#allocation0]]
  $region58: #{encoder_rnn_forward.1} parent=0
    _
  %s14 = ssub.s32 1, %s12
  %s15 = scalar_select 0, %s14, %s12
  // Predicated region
  $region2: #{encoder_rnn_forward.1} parent=0 // pred_check
    _
  $region3: #{encoder_rnn_forward.1} parent=0 // pred_check_branch
    %17 = sbr.rel (0) target = $region5
  $region4: #{encoder_rnn_forward.1} parent=0 // pred_region
    _
  $region5: #{encoder_rnn_forward.1} parent=0 // pred_fallthru
    _
  // Predicated region
  $region6: #{encoder_rnn_forward.1} parent=0 // pred_check
    _
  $region7: #{encoder_rnn_forward.1} parent=0 // pred_check_branch
    %19 = sbr.rel (0) target = $region9
  $region8: #{encoder_rnn_forward.1} parent=0 // pred_region
    _
  $region9: #{encoder_rnn_forward.1} parent=0 // pred_fallthru
    _
  // Predicated region
  $region10: #{encoder_rnn_forward.1} parent=0 // pred_check
    _
  $region11: #{encoder_rnn_forward.1} parent=0 // pred_check_branch
    %21 = sbr.rel (0) target = $region13
  $region12: #{encoder_rnn_forward.1} parent=0 // pred_region
    _
  $region13: #{encoder_rnn_forward.1} parent=0 // pred_fallthru
    _
  // Predicated region
  $region14: #{encoder_rnn_forward.1} parent=0 // pred_check
    _
  $region15: #{encoder_rnn_forward.1} parent=0 // pred_check_branch
    %23 = sbr.rel (0) target = $region17
  $region16: #{encoder_rnn_forward.1} parent=0 // pred_region
    _
  $region17: #{encoder_rnn_forward.1} parent=0 // pred_fallthru
    _
  // Predicated region
  $region18: #{encoder_rnn_forward.1} parent=0 // pred_check
    _
  $region19: #{encoder_rnn_forward.1} parent=0 // pred_check_branch
    %25 = sbr.rel (0) target = $region21
  $region20: #{encoder_rnn_forward.1} parent=0 // pred_region
    _
  $region21: #{encoder_rnn_forward.1} parent=0 // pred_fallthru
    _
  // Predicated region
  $region22: #{encoder_rnn_forward.1} parent=0 // pred_check
    _
  $region23: #{encoder_rnn_forward.1} parent=0 // pred_check_branch
    %27 = sbr.rel (0) target = $region25
  $region24: #{encoder_rnn_forward.1} parent=0 // pred_region
    _
  $region25: #{encoder_rnn_forward.1} parent=0 // pred_fallthru
    _
  // Predicated region
  $region26: #{encoder_rnn_forward.1} parent=0 // pred_check
    _
  $region27: #{encoder_rnn_forward.1} parent=0 // pred_check_branch
    %29 = sbr.rel (0) target = $region29
  $region28: #{encoder_rnn_forward.1} parent=0 // pred_region
    _
  $region29: #{encoder_rnn_forward.1} parent=0 // pred_fallthru
    _
  // Predicated region
  $region30: #{encoder_rnn_forward.1} parent=0 // pred_check
    _
  $region31: #{encoder_rnn_forward.1} parent=0 // pred_check_branch
    %31 = sbr.rel (0) target = $region33
  $region32: #{encoder_rnn_forward.1} parent=0 // pred_region
    _
  $region33: #{encoder_rnn_forward.1} parent=0 // pred_fallthru
    _
  %v32 = vld [vmem:[%s0] sm:$0xff]
  %v33 = vld [vmem:[%s0 + $0x8] sm:$0xff]
  %v34 = vld [vmem:[%s0 + $0x10] sm:$0xff]
  %v35 = vld [vmem:[%s0 + $0x18] sm:$0xff]
  %v36 = vld [vmem:[%s0 + $0x20] sm:$0xff]
  %v37 = vld [vmem:[%s0 + $0x28] sm:$0xff]
  %v38 = vld [vmem:[%s0 + $0x30] sm:$0xff]
  %v39 = vld [vmem:[%s0 + $0x38] sm:$0xff]
  %v40 = vld [vmem:[%s1] sm:$0x1f]
  %v41 = vld [vmem:[%s1 + $0x8] sm:$0x1f]
  %v42 = vld [vmem:[%s4] sm:$0x3]
  %v44 = vlaneseq
  %v45 = vshrl.u32 %v44, 7
  %v46 = vsub.s32 0, %v45
  %v47 = vrot.slane %v42, %v46
  %v48 = vlaneseq
  %v49 = vshrl.u32 %v48, 7
  %v50 = vsub.s32 1, %v49
  %v51 = vrot.slane %v42, %v50
  %vm54 = vcmask 39936
  %v56 = vsel %vm54, %v32, 0
  %v59 = vsel %vm54, %v33, 0
  %v62 = vsel %vm54, %v34, 0
  %v65 = vsel %vm54, %v35, 0
  %v68 = vsel %vm54, %v36, 0
  %v71 = vsel %vm54, %v37, 0
  %v74 = vsel %vm54, %v38, 0
  %v77 = vsel %vm54, %v39, 0
  %vm79 = vcmask 1044480
  %v81 = vsel %vm79, %v40, 0
  %v84 = vsel %vm79, %v41, 0
  %86 = vmatprep.subr.mxu0 0.0
  %87 = vmatpush1.msra.mxu0 0.0
  %88 = vmatprep.subr.mxu0 0.0
  %89 = vmatpush1.msra.mxu0 0.0
  %90 = vmatprep.subr.mxu0 0.0
  %91 = vmatpush1.msra.mxu0 0.0
  %92 = vmatprep.subr.mxu0 0.0
  %93 = vmatpush1.msra.mxu0 0.0
  %94 = vmatprep.subr.mxu0 0.0
  %95 = vmatpush1.msra.mxu0 0.0
  %96 = vmatprep.subr.mxu0 0.0
  %97 = vmatpush1.msra.mxu0 0.0
  %98 = vmatprep.subr.mxu0 0.0
  %99 = vmatpush1.msra.mxu0 0.0
  %100 = vmatprep.subr.mxu0 0.0
  %101 = vmatpush1.msra.mxu0 0.0
  %102 = vmatprep.subr.mxu0 0.0
  %103 = vmatpush1.msra.mxu0 0.0
  %104 = vmatprep.subr.mxu0 0.0
  %105 = vmatpush1.msra.mxu0 0.0
  %106 = vmatprep.subr.mxu0 0.0
  %107 = vmatpush1.msra.mxu0 0.0
  %108 = vmatprep.subr.mxu0 0.0
  %109 = vmatpush1.msra.mxu0 0.0
  %110 = vmatprep.subr.mxu0 0.0
  %111 = vmatpush1.msra.mxu0 0.0
  %112 = vmatprep.subr.mxu0 0.0
  %113 = vmatpush1.msra.mxu0 0.0
  %114 = vmatprep.subr.mxu0 0.0
  %115 = vmatpush1.msra.mxu0 0.0
  %116 = vmatprep.subr.mxu0 %v84
  %117 = vmatpush1.msra.mxu0 %v81
  %118 = vmatprep.subr.mxu0 0.0
  %119 = vmatpush2.msra.mxu0 0.0
  %120 = vmatprep.subr.mxu0 0.0
  %121 = vmatpush2.msra.mxu0 0.0
  %122 = vmatprep.subr.mxu0 0.0
  %123 = vmatpush2.msra.mxu0 0.0
  %124 = vmatprep.subr.mxu0 0.0
  %125 = vmatpush2.msra.mxu0 0.0
  %126 = vmatprep.subr.mxu0 0.0
  %127 = vmatpush2.msra.mxu0 0.0
  %128 = vmatprep.subr.mxu0 0.0
  %129 = vmatpush2.msra.mxu0 0.0
  %130 = vmatprep.subr.mxu0 0.0
  %131 = vmatpush2.msra.mxu0 0.0
  %132 = vmatprep.subr.mxu0 0.0
  %133 = vmatpush2.msra.mxu0 0.0
  %134 = vmatprep.subr.mxu0 0.0
  %135 = vmatpush2.msra.mxu0 0.0
  %136 = vmatprep.subr.mxu0 0.0
  %137 = vmatpush2.msra.mxu0 0.0
  %138 = vmatprep.subr.mxu0 0.0
  %139 = vmatpush2.msra.mxu0 0.0
  %140 = vmatprep.subr.mxu0 0.0
  %141 = vmatpush2.msra.mxu0 0.0
  %142 = vmatprep.subr.mxu0 0.0
  %143 = vmatpush2.msra.mxu0 0.0
  %144 = vmatprep.subr.mxu0 0.0
  %145 = vmatpush2.msra.mxu0 0.0
  %146 = vmatprep.subr.mxu0 0.0
  %147 = vmatpush2.msra.mxu0 0.0
  %148 = vmatprep.subr.mxu0 0.0
  %149 = vmatpush2.msra.mxu0 0.0
  %150 = vmatprep.mubr.f32.mxu0 0.0
  %151 = vmatmul.mubr.f32.gmra.mxu0 %v56
  %v152 = vpop.f32.mrf.mxu0
  %v153 = vadd.f32 %v47, %v152
  %v154 = vpop.f32.mrf.mxu0
  %v155 = vadd.f32 %v51, %v154
  %156 = vmatprep.mubr.f32.mxu0 0.0
  %157 = vmatmul.mubr.f32.gmra.mxu0 %v59
  %v158 = vpop.f32.mrf.mxu0
  %v159 = vadd.f32 %v47, %v158
  %v160 = vpop.f32.mrf.mxu0
  %v161 = vadd.f32 %v51, %v160
  %162 = vmatprep.mubr.f32.mxu0 0.0
  %163 = vmatmul.mubr.f32.gmra.mxu0 %v62
  %v164 = vpop.f32.mrf.mxu0
  %v165 = vadd.f32 %v47, %v164
  %v166 = vpop.f32.mrf.mxu0
  %v167 = vadd.f32 %v51, %v166
  %168 = vmatprep.mubr.f32.mxu0 0.0
  %169 = vmatmul.mubr.f32.gmra.mxu0 %v65
  %v170 = vpop.f32.mrf.mxu0
  %v171 = vadd.f32 %v47, %v170
  %v172 = vpop.f32.mrf.mxu0
  %v173 = vadd.f32 %v51, %v172
  %174 = vmatprep.mubr.f32.mxu0 0.0
  %175 = vmatmul.mubr.f32.gmra.mxu0 %v68
  %v176 = vpop.f32.mrf.mxu0
  %v177 = vadd.f32 %v47, %v176
  %v178 = vpop.f32.mrf.mxu0
  %v179 = vadd.f32 %v51, %v178
  %180 = vmatprep.mubr.f32.mxu0 0.0
  %181 = vmatmul.mubr.f32.gmra.mxu0 %v71
  %v182 = vpop.f32.mrf.mxu0
  %v183 = vadd.f32 %v47, %v182
  %v184 = vpop.f32.mrf.mxu0
  %v185 = vadd.f32 %v51, %v184
  %186 = vmatprep.mubr.f32.mxu0 0.0
  %187 = vmatmul.mubr.f32.gmra.mxu0 %v74
  %v188 = vpop.f32.mrf.mxu0
  %v189 = vadd.f32 %v47, %v188
  %v190 = vpop.f32.mrf.mxu0
  %v191 = vadd.f32 %v51, %v190
  %192 = vmatprep.mubr.f32.mxu0 0.0
  %193 = vmatmul.mubr.f32.gmra.mxu0 %v77
  %v194 = vpop.f32.mrf.mxu0
  %v195 = vadd.f32 %v47, %v194
  %v196 = vpop.f32.mrf.mxu0
  %v197 = vadd.f32 %v51, %v196
  %198 = vdwg.mxu0
  %199 = vst [vmem:[#allocation2] sm:$0xff] %v153
  %200 = vst [vmem:[#allocation2 + $0x8] sm:$0xff] %v155
  %201 = vst [vmem:[#allocation2 + $0x10] sm:$0xff] %v159
  %202 = vst [vmem:[#allocation2 + $0x18] sm:$0xff] %v161
  %203 = vst [vmem:[#allocation2 + $0x20] sm:$0xff] %v165
  %204 = vst [vmem:[#allocation2 + $0x28] sm:$0xff] %v167
  %205 = vst [vmem:[#allocation2 + $0x30] sm:$0xff] %v171
  %206 = vst [vmem:[#allocation2 + $0x38] sm:$0xff] %v173
  %207 = vst [vmem:[#allocation2 + $0x40] sm:$0xff] %v177
  %208 = vst [vmem:[#allocation2 + $0x48] sm:$0xff] %v179
  %209 = vst [vmem:[#allocation2 + $0x50] sm:$0xff] %v183
  %210 = vst [vmem:[#allocation2 + $0x58] sm:$0xff] %v185
  %211 = vst [vmem:[#allocation2 + $0x60] sm:$0xff] %v189
  %212 = vst [vmem:[#allocation2 + $0x68] sm:$0xff] %v191
  %213 = vst [vmem:[#allocation2 + $0x70] sm:$0xff] %v195
  %214 = vst [vmem:[#allocation2 + $0x78] sm:$0xff] %v197
  %v215 = vld [vmem:[%s2] sm:$0x1f]
  %v216 = vld [vmem:[%s2 + $0x8] sm:$0x1f]
  %v218 = vsel %vm79, %v215, 0
  %v221 = vsel %vm79, %v216, 0
  %223 = vmatprep.subr.mxu0 0.0
  %224 = vmatpush1.msra.mxu0 0.0
  %225 = vmatprep.subr.mxu0 0.0
  %226 = vmatpush1.msra.mxu0 0.0
  %227 = vmatprep.subr.mxu0 0.0
  %228 = vmatpush1.msra.mxu0 0.0
  %229 = vmatprep.subr.mxu0 0.0
  %230 = vmatpush1.msra.mxu0 0.0
  %231 = vmatprep.subr.mxu0 0.0
  %232 = vmatpush1.msra.mxu0 0.0
  %233 = vmatprep.subr.mxu0 0.0
  %234 = vmatpush1.msra.mxu0 0.0
  %235 = vmatprep.subr.mxu0 0.0
  %236 = vmatpush1.msra.mxu0 0.0
  %237 = vmatprep.subr.mxu0 0.0
  %238 = vmatpush1.msra.mxu0 0.0
  %239 = vmatprep.subr.mxu0 0.0
  %240 = vmatpush1.msra.mxu0 0.0
  %241 = vmatprep.subr.mxu0 0.0
  %242 = vmatpush1.msra.mxu0 0.0
  %243 = vmatprep.subr.mxu0 0.0
  %244 = vmatpush1.msra.mxu0 0.0
  %245 = vmatprep.subr.mxu0 0.0
  %246 = vmatpush1.msra.mxu0 0.0
  %247 = vmatprep.subr.mxu0 0.0
  %248 = vmatpush1.msra.mxu0 0.0
  %249 = vmatprep.subr.mxu0 0.0
  %250 = vmatpush1.msra.mxu0 0.0
  %251 = vmatprep.subr.mxu0 0.0
  %252 = vmatpush1.msra.mxu0 0.0
  %253 = vmatprep.subr.mxu0 %v221
  %254 = vmatpush1.msra.mxu0 %v218
  %255 = vmatprep.subr.mxu0 0.0
  %256 = vmatpush2.msra.mxu0 0.0
  %257 = vmatprep.subr.mxu0 0.0
  %258 = vmatpush2.msra.mxu0 0.0
  %259 = vmatprep.subr.mxu0 0.0
  %260 = vmatpush2.msra.mxu0 0.0
  %261 = vmatprep.subr.mxu0 0.0
  %262 = vmatpush2.msra.mxu0 0.0
  %263 = vmatprep.subr.mxu0 0.0
  %264 = vmatpush2.msra.mxu0 0.0
  %265 = vmatprep.subr.mxu0 0.0
  %266 = vmatpush2.msra.mxu0 0.0
  %267 = vmatprep.subr.mxu0 0.0
  %268 = vmatpush2.msra.mxu0 0.0
  %269 = vmatprep.subr.mxu0 0.0
  %270 = vmatpush2.msra.mxu0 0.0
  %271 = vmatprep.subr.mxu0 0.0
  %272 = vmatpush2.msra.mxu0 0.0
  %273 = vmatprep.subr.mxu0 0.0
  %274 = vmatpush2.msra.mxu0 0.0
  %275 = vmatprep.subr.mxu0 0.0
  %276 = vmatpush2.msra.mxu0 0.0
  %277 = vmatprep.subr.mxu0 0.0
  %278 = vmatpush2.msra.mxu0 0.0
  %279 = vmatprep.subr.mxu0 0.0
  %280 = vmatpush2.msra.mxu0 0.0
  %281 = vmatprep.subr.mxu0 0.0
  %282 = vmatpush2.msra.mxu0 0.0
  %283 = vmatprep.subr.mxu0 0.0
  %284 = vmatpush2.msra.mxu0 0.0
  %285 = vmatprep.subr.mxu0 0.0
  %286 = vmatpush2.msra.mxu0 0.0
  %287 = vmatprep.mubr.f32.mxu0 0.0
  %288 = vmatmul.mubr.f32.gmra.mxu0 %v56
  %v289 = vpop.f32.mrf.mxu0
  %v290 = vadd.f32 0.0, %v289
  %v291 = vpop.f32.mrf.mxu0
  %v292 = vadd.f32 0.0, %v291
  %293 = vmatprep.mubr.f32.mxu0 0.0
  %294 = vmatmul.mubr.f32.gmra.mxu0 %v59
  %v295 = vpop.f32.mrf.mxu0
  %v296 = vadd.f32 0.0, %v295
  %v297 = vpop.f32.mrf.mxu0
  %v298 = vadd.f32 0.0, %v297
  %299 = vmatprep.mubr.f32.mxu0 0.0
  %300 = vmatmul.mubr.f32.gmra.mxu0 %v62
  %v301 = vpop.f32.mrf.mxu0
  %v302 = vadd.f32 0.0, %v301
  %v303 = vpop.f32.mrf.mxu0
  %v304 = vadd.f32 0.0, %v303
  %305 = vmatprep.mubr.f32.mxu0 0.0
  %306 = vmatmul.mubr.f32.gmra.mxu0 %v65
  %v307 = vpop.f32.mrf.mxu0
  %v308 = vadd.f32 0.0, %v307
  %v309 = vpop.f32.mrf.mxu0
  %v310 = vadd.f32 0.0, %v309
  %311 = vmatprep.mubr.f32.mxu0 0.0
  %312 = vmatmul.mubr.f32.gmra.mxu0 %v68
  %v313 = vpop.f32.mrf.mxu0
  %v314 = vadd.f32 0.0, %v313
  %v315 = vpop.f32.mrf.mxu0
  %v316 = vadd.f32 0.0, %v315
  %317 = vmatprep.mubr.f32.mxu0 0.0
  %318 = vmatmul.mubr.f32.gmra.mxu0 %v71
  %v319 = vpop.f32.mrf.mxu0
  %v320 = vadd.f32 0.0, %v319
  %v321 = vpop.f32.mrf.mxu0
  %v322 = vadd.f32 0.0, %v321
  %323 = vmatprep.mubr.f32.mxu0 0.0
  %324 = vmatmul.mubr.f32.gmra.mxu0 %v74
  %v325 = vpop.f32.mrf.mxu0
  %v326 = vadd.f32 0.0, %v325
  %v327 = vpop.f32.mrf.mxu0
  %v328 = vadd.f32 0.0, %v327
  %329 = vmatprep.mubr.f32.mxu0 0.0
  %330 = vmatmul.mubr.f32.gmra.mxu0 %v77
  %v331 = vpop.f32.mrf.mxu0
  %v332 = vadd.f32 0.0, %v331
  %v333 = vpop.f32.mrf.mxu0
  %v334 = vadd.f32 0.0, %v333
  %335 = vdwg.mxu0
  %336 = vst [vmem:[#allocation3] sm:$0xff] %v290
  %337 = vst [vmem:[#allocation3 + $0x8] sm:$0xff] %v292
  %338 = vst [vmem:[#allocation3 + $0x10] sm:$0xff] %v296
  %339 = vst [vmem:[#allocation3 + $0x18] sm:$0xff] %v298
  %340 = vst [vmem:[#allocation3 + $0x20] sm:$0xff] %v302
  %341 = vst [vmem:[#allocation3 + $0x28] sm:$0xff] %v304
  %342 = vst [vmem:[#allocation3 + $0x30] sm:$0xff] %v308
  %343 = vst [vmem:[#allocation3 + $0x38] sm:$0xff] %v310
  %344 = vst [vmem:[#allocation3 + $0x40] sm:$0xff] %v314
  %345 = vst [vmem:[#allocation3 + $0x48] sm:$0xff] %v316
  %346 = vst [vmem:[#allocation3 + $0x50] sm:$0xff] %v320
  %347 = vst [vmem:[#allocation3 + $0x58] sm:$0xff] %v322
  %348 = vst [vmem:[#allocation3 + $0x60] sm:$0xff] %v326
  %349 = vst [vmem:[#allocation3 + $0x68] sm:$0xff] %v328
  %350 = vst [vmem:[#allocation3 + $0x70] sm:$0xff] %v332
  %351 = vst [vmem:[#allocation3 + $0x78] sm:$0xff] %v334
  %v352 = vld [vmem:[%s3] sm:$0xff]
  %v353 = vld [vmem:[%s3 + $0x8] sm:$0xff]
  %v354 = vld [vmem:[%s3 + $0x10] sm:$0xff]
  %v355 = vld [vmem:[%s3 + $0x18] sm:$0xff]
  %v356 = vld [vmem:[%s3 + $0x20] sm:$0xff]
  %v357 = vld [vmem:[%s3 + $0x28] sm:$0xff]
  %v358 = vld [vmem:[%s3 + $0x30] sm:$0xff]
  %v359 = vld [vmem:[%s3 + $0x38] sm:$0xff]
  %v360 = vld [vmem:[%s3 + $0x40] sm:$0xff]
  %v361 = vld [vmem:[%s3 + $0x48] sm:$0xff]
  %v362 = vld [vmem:[%s3 + $0x50] sm:$0xff]
  %v363 = vld [vmem:[%s3 + $0x58] sm:$0xff]
  %v364 = vld [vmem:[%s3 + $0x60] sm:$0xff]
  %v365 = vld [vmem:[%s3 + $0x68] sm:$0xff]
  %v366 = vld [vmem:[%s3 + $0x70] sm:$0xff]
  %v367 = vld [vmem:[%s3 + $0x78] sm:$0xff]
  %v368 = vlaneseq
  %v369 = vand.u32 %v368, 127
  %v370 = vadd.s32 %v369, 128
  %vm371 = vcmp.ge.s32.totalorder %v369, 128
  %vm372 = vcmp.ge.s32.totalorder %v370, 128
  %vm373 = vcmp.lt.s32.totalorder %v369, 192
  %vm374 = vcmp.lt.s32.totalorder %v370, 192
  %vm375 = vmand %vm371, %vm373
  %vm376 = vmand %vm372, %vm374
  %s377 = smul.u32 0, 2
  %s378 = smul.addr %s377, 8
  %s379 = scalar_lea.vmem [#allocation2], %s378
  %v380 = vld [vmem:[%s379] sm:$0xff]
  %v381 = vld [vmem:[%s379 + $0x8] sm:$0xff]
  %s382 = smul.u32 7, 2
  %s383 = smul.addr %s382, 8
  %s384 = scalar_lea.vmem [#allocation3], %s383
  %v385 = vld [vmem:[%s384] sm:$0xff]
  %v386 = vld [vmem:[%s384 + $0x8] sm:$0xff]
  %v387 = vadd.f32 %v380, %v385
  %v388 = vadd.f32 %v381, %v386
  %vm389 = vcmask 523264
  %v391 = vsel %vm389, 0.0, 0
  %393 = vmatprep.subr.mxu0 0.0
  %394 = vmatpush1.msra.mxu0 0.0
  %395 = vmatprep.subr.mxu0 0.0
  %396 = vmatpush1.msra.mxu0 0.0
  %397 = vmatprep.subr.mxu0 0.0
  %398 = vmatpush1.msra.mxu0 0.0
  %399 = vmatprep.subr.mxu0 0.0
  %400 = vmatpush1.msra.mxu0 0.0
  %401 = vmatprep.subr.mxu0 0.0
  %402 = vmatpush1.msra.mxu0 0.0
  %403 = vmatprep.subr.mxu0 0.0
  %404 = vmatpush1.msra.mxu0 0.0
  %405 = vmatprep.subr.mxu0 0.0
  %406 = vmatpush1.msra.mxu0 0.0
  %407 = vmatprep.subr.mxu0 0.0
  %408 = vmatpush1.msra.mxu0 0.0
  %409 = vmatprep.subr.mxu0 %v367
  %410 = vmatpush1.msra.mxu0 %v366
  %411 = vmatprep.subr.mxu0 %v365
  %412 = vmatpush1.msra.mxu0 %v364
  %413 = vmatprep.subr.mxu0 %v363
  %414 = vmatpush1.msra.mxu0 %v362
  %415 = vmatprep.subr.mxu0 %v361
  %416 = vmatpush1.msra.mxu0 %v360
  %417 = vmatprep.subr.mxu0 %v359
  %418 = vmatpush1.msra.mxu0 %v358
  %419 = vmatprep.subr.mxu0 %v357
  %420 = vmatpush1.msra.mxu0 %v356
  %421 = vmatprep.subr.mxu0 %v355
  %422 = vmatpush1.msra.mxu0 %v354
  %423 = vmatprep.subr.mxu0 %v353
  %424 = vmatpush1.msra.mxu0 %v352
  %425 = vmatprep.subr.mxu0 0.0
  %426 = vmatpush2.msra.mxu0 0.0
  %427 = vmatprep.subr.mxu0 0.0
  %428 = vmatpush2.msra.mxu0 0.0
  %429 = vmatprep.subr.mxu0 0.0
  %430 = vmatpush2.msra.mxu0 0.0
  %431 = vmatprep.subr.mxu0 0.0
  %432 = vmatpush2.msra.mxu0 0.0
  %433 = vmatprep.subr.mxu0 0.0
  %434 = vmatpush2.msra.mxu0 0.0
  %435 = vmatprep.subr.mxu0 0.0
  %436 = vmatpush2.msra.mxu0 0.0
  %437 = vmatprep.subr.mxu0 0.0
  %438 = vmatpush2.msra.mxu0 0.0
  %439 = vmatprep.subr.mxu0 0.0
  %440 = vmatpush2.msra.mxu0 0.0
  %441 = vmatprep.subr.mxu0 0.0
  %442 = vmatpush2.msra.mxu0 0.0
  %443 = vmatprep.subr.mxu0 0.0
  %444 = vmatpush2.msra.mxu0 0.0
  %445 = vmatprep.subr.mxu0 0.0
  %446 = vmatpush2.msra.mxu0 0.0
  %447 = vmatprep.subr.mxu0 0.0
  %448 = vmatpush2.msra.mxu0 0.0
  %449 = vmatprep.subr.mxu0 0.0
  %450 = vmatpush2.msra.mxu0 0.0
  %451 = vmatprep.subr.mxu0 0.0
  %452 = vmatpush2.msra.mxu0 0.0
  %453 = vmatprep.subr.mxu0 0.0
  %454 = vmatpush2.msra.mxu0 0.0
  %455 = vmatprep.subr.mxu0 0.0
  %456 = vmatpush2.msra.mxu0 0.0
  %457 = vmatprep.mubr.f32.mxu0 0.0
  %458 = vmatmul.mubr.f32.gmra.mxu0 %v391
  %v459 = vpop.f32.mrf.mxu0
  %v460 = vadd.f32 0.0, %v459
  %v461 = vpop.f32.mrf.mxu0
  %v462 = vadd.f32 0.0, %v461
  %463 = vdwg.mxu0
  %v464 = vadd.f32 %v387, %v460
  %v465 = vadd.f32 %v388, %v462
  %v466 = vtanh.pop %v464
  %v467 = vtanh.pop %v465
  %v468 = vxor.u32 %v464, 2147483648
  %v469 = vxor.u32 %v465, 2147483648
  %v470 = vmul.f32 %v468, 1.442695
  %v471 = vpow.pop %v470
  %v472 = vmul.f32 %v469, 1.442695
  %v473 = vpow.pop %v472
  %v474 = vadd.f32 %v471, 1.0
  %v475 = vadd.f32 %v473, 1.0
  %v476 = vrcp.pop %v474
  %v477 = vmul.f32 1.0, %v476
  %v478 = vrcp.pop %v475
  %v479 = vmul.f32 1.0, %v478
  %v480 = vsel %vm375, %v466, %v477
  %v481 = vsel %vm376, %v467, %v479
  %v482 = vmul.f32 %v480, 0.0
  %v483 = vmul.f32 %v480, %v481
  %485 = vrot.lane.b32.xlu0 %v483, 64
  %v486 = vpop.permute.xlu0 %485
  %v488 = vadd.f32 %v482, %v486
  %v489 = vtanh.pop %v488
  %v490 = vmul.f32 %v481, %v489
  %s491 = smul.u32 1, 2
  %s492 = smul.addr %s491, 8
  %s493 = scalar_lea.vmem [#allocation2], %s492
  %v494 = vld [vmem:[%s493] sm:$0xff]
  %v495 = vld [vmem:[%s493 + $0x8] sm:$0xff]
  %s496 = smul.u32 6, 2
  %s497 = smul.addr %s496, 8
  %s498 = scalar_lea.vmem [#allocation3], %s497
  %v499 = vld [vmem:[%s498] sm:$0xff]
  %v500 = vld [vmem:[%s498 + $0x8] sm:$0xff]
  %v501 = vadd.f32 %v494, %v499
  %v502 = vadd.f32 %v495, %v500
  %504 = vrot.lane.b32.xlu0 %v490, 64
  %v505 = vpop.permute.xlu0 %504
  %v506 = vsel %vm389, %v505, 0
  %508 = vmatprep.subr.mxu0 0.0
  %509 = vmatpush1.msra.mxu0 0.0
  %510 = vmatprep.subr.mxu0 0.0
  %511 = vmatpush1.msra.mxu0 0.0
  %512 = vmatprep.subr.mxu0 0.0
  %513 = vmatpush1.msra.mxu0 0.0
  %514 = vmatprep.subr.mxu0 0.0
  %515 = vmatpush1.msra.mxu0 0.0
  %516 = vmatprep.subr.mxu0 0.0
  %517 = vmatpush1.msra.mxu0 0.0
  %518 = vmatprep.subr.mxu0 0.0
  %519 = vmatpush1.msra.mxu0 0.0
  %520 = vmatprep.subr.mxu0 0.0
  %521 = vmatpush1.msra.mxu0 0.0
  %522 = vmatprep.subr.mxu0 0.0
  %523 = vmatpush1.msra.mxu0 0.0
  %524 = vmatprep.subr.mxu0 %v367
  %525 = vmatpush1.msra.mxu0 %v366
  %526 = vmatprep.subr.mxu0 %v365
  %527 = vmatpush1.msra.mxu0 %v364
  %528 = vmatprep.subr.mxu0 %v363
  %529 = vmatpush1.msra.mxu0 %v362
  %530 = vmatprep.subr.mxu0 %v361
  %531 = vmatpush1.msra.mxu0 %v360
  %532 = vmatprep.subr.mxu0 %v359
  %533 = vmatpush1.msra.mxu0 %v358
  %534 = vmatprep.subr.mxu0 %v357
  %535 = vmatpush1.msra.mxu0 %v356
  %536 = vmatprep.subr.mxu0 %v355
  %537 = vmatpush1.msra.mxu0 %v354
  %538 = vmatprep.subr.mxu0 %v353
  %539 = vmatpush1.msra.mxu0 %v352
  %540 = vmatprep.subr.mxu0 0.0
  %541 = vmatpush2.msra.mxu0 0.0
  %542 = vmatprep.subr.mxu0 0.0
  %543 = vmatpush2.msra.mxu0 0.0
  %544 = vmatprep.subr.mxu0 0.0
  %545 = vmatpush2.msra.mxu0 0.0
  %546 = vmatprep.subr.mxu0 0.0
  %547 = vmatpush2.msra.mxu0 0.0
  %548 = vmatprep.subr.mxu0 0.0
  %549 = vmatpush2.msra.mxu0 0.0
  %550 = vmatprep.subr.mxu0 0.0
  %551 = vmatpush2.msra.mxu0 0.0
  %552 = vmatprep.subr.mxu0 0.0
  %553 = vmatpush2.msra.mxu0 0.0
  %554 = vmatprep.subr.mxu0 0.0
  %555 = vmatpush2.msra.mxu0 0.0
  %556 = vmatprep.subr.mxu0 0.0
  %557 = vmatpush2.msra.mxu0 0.0
  %558 = vmatprep.subr.mxu0 0.0
  %559 = vmatpush2.msra.mxu0 0.0
  %560 = vmatprep.subr.mxu0 0.0
  %561 = vmatpush2.msra.mxu0 0.0
  %562 = vmatprep.subr.mxu0 0.0
  %563 = vmatpush2.msra.mxu0 0.0
  %564 = vmatprep.subr.mxu0 0.0
  %565 = vmatpush2.msra.mxu0 0.0
  %566 = vmatprep.subr.mxu0 0.0
  %567 = vmatpush2.msra.mxu0 0.0
  %568 = vmatprep.subr.mxu0 0.0
  %569 = vmatpush2.msra.mxu0 0.0
  %570 = vmatprep.subr.mxu0 0.0
  %571 = vmatpush2.msra.mxu0 0.0
  %572 = vmatprep.mubr.f32.mxu0 0.0
  %573 = vmatmul.mubr.f32.gmra.mxu0 %v506
  %v574 = vpop.f32.mrf.mxu0
  %v575 = vadd.f32 0.0, %v574
  %v576 = vpop.f32.mrf.mxu0
  %v577 = vadd.f32 0.0, %v576
  %578 = vdwg.mxu0
  %v579 = vadd.f32 %v501, %v575
  %v580 = vadd.f32 %v502, %v577
  %v581 = vtanh.pop %v579
  %v582 = vtanh.pop %v580
  %v583 = vxor.u32 %v579, 2147483648
  %v584 = vxor.u32 %v580, 2147483648
  %v585 = vmul.f32 %v583, 1.442695
  %v586 = vpow.pop %v585
  %v587 = vmul.f32 %v584, 1.442695
  %v588 = vpow.pop %v587
  %v589 = vadd.f32 %v586, 1.0
  %v590 = vadd.f32 %v588, 1.0
  %v591 = vrcp.pop %v589
  %v592 = vmul.f32 1.0, %v591
  %v593 = vrcp.pop %v590
  %v594 = vmul.f32 1.0, %v593
  %v595 = vsel %vm375, %v581, %v592
  %v596 = vsel %vm376, %v582, %v594
  %v597 = vmul.f32 %v595, %v488
  %v598 = vmul.f32 %v595, %v596
  %600 = vrot.lane.b32.xlu0 %v598, 64
  %v601 = vpop.permute.xlu0 %600
  %v603 = vadd.f32 %v597, %v601
  %v604 = vtanh.pop %v603
  %v605 = vmul.f32 %v596, %v604
  %s606 = smul.u32 2, 2
  %s607 = smul.addr %s606, 8
  %s608 = scalar_lea.vmem [#allocation2], %s607
  %v609 = vld [vmem:[%s608] sm:$0xff]
  %v610 = vld [vmem:[%s608 + $0x8] sm:$0xff]
  %s611 = smul.u32 5, 2
  %s612 = smul.addr %s611, 8
  %s613 = scalar_lea.vmem [#allocation3], %s612
  %v614 = vld [vmem:[%s613] sm:$0xff]
  %v615 = vld [vmem:[%s613 + $0x8] sm:$0xff]
  %v616 = vadd.f32 %v609, %v614
  %v617 = vadd.f32 %v610, %v615
  %619 = vrot.lane.b32.xlu0 %v605, 64
  %v620 = vpop.permute.xlu0 %619
  %v621 = vsel %vm389, %v620, 0
  %623 = vmatprep.subr.mxu0 0.0
  %624 = vmatpush1.msra.mxu0 0.0
  %625 = vmatprep.subr.mxu0 0.0
  %626 = vmatpush1.msra.mxu0 0.0
  %627 = vmatprep.subr.mxu0 0.0
  %628 = vmatpush1.msra.mxu0 0.0
  %629 = vmatprep.subr.mxu0 0.0
  %630 = vmatpush1.msra.mxu0 0.0
  %631 = vmatprep.subr.mxu0 0.0
  %632 = vmatpush1.msra.mxu0 0.0
  %633 = vmatprep.subr.mxu0 0.0
  %634 = vmatpush1.msra.mxu0 0.0
  %635 = vmatprep.subr.mxu0 0.0
  %636 = vmatpush1.msra.mxu0 0.0
  %637 = vmatprep.subr.mxu0 0.0
  %638 = vmatpush1.msra.mxu0 0.0
  %639 = vmatprep.subr.mxu0 %v367
  %640 = vmatpush1.msra.mxu0 %v366
  %641 = vmatprep.subr.mxu0 %v365
  %642 = vmatpush1.msra.mxu0 %v364
  %643 = vmatprep.subr.mxu0 %v363
  %644 = vmatpush1.msra.mxu0 %v362
  %645 = vmatprep.subr.mxu0 %v361
  %646 = vmatpush1.msra.mxu0 %v360
  %647 = vmatprep.subr.mxu0 %v359
  %648 = vmatpush1.msra.mxu0 %v358
  %649 = vmatprep.subr.mxu0 %v357
  %650 = vmatpush1.msra.mxu0 %v356
  %651 = vmatprep.subr.mxu0 %v355
  %652 = vmatpush1.msra.mxu0 %v354
  %653 = vmatprep.subr.mxu0 %v353
  %654 = vmatpush1.msra.mxu0 %v352
  %655 = vmatprep.subr.mxu0 0.0
  %656 = vmatpush2.msra.mxu0 0.0
  %657 = vmatprep.subr.mxu0 0.0
  %658 = vmatpush2.msra.mxu0 0.0
  %659 = vmatprep.subr.mxu0 0.0
  %660 = vmatpush2.msra.mxu0 0.0
  %661 = vmatprep.subr.mxu0 0.0
  %662 = vmatpush2.msra.mxu0 0.0
  %663 = vmatprep.subr.mxu0 0.0
  %664 = vmatpush2.msra.mxu0 0.0
  %665 = vmatprep.subr.mxu0 0.0
  %666 = vmatpush2.msra.mxu0 0.0
  %667 = vmatprep.subr.mxu0 0.0
  %668 = vmatpush2.msra.mxu0 0.0
  %669 = vmatprep.subr.mxu0 0.0
  %670 = vmatpush2.msra.mxu0 0.0
  %671 = vmatprep.subr.mxu0 0.0
  %672 = vmatpush2.msra.mxu0 0.0
  %673 = vmatprep.subr.mxu0 0.0
  %674 = vmatpush2.msra.mxu0 0.0
  %675 = vmatprep.subr.mxu0 0.0
  %676 = vmatpush2.msra.mxu0 0.0
  %677 = vmatprep.subr.mxu0 0.0
  %678 = vmatpush2.msra.mxu0 0.0
  %679 = vmatprep.subr.mxu0 0.0
  %680 = vmatpush2.msra.mxu0 0.0
  %681 = vmatprep.subr.mxu0 0.0
  %682 = vmatpush2.msra.mxu0 0.0
  %683 = vmatprep.subr.mxu0 0.0
  %684 = vmatpush2.msra.mxu0 0.0
  %685 = vmatprep.subr.mxu0 0.0
  %686 = vmatpush2.msra.mxu0 0.0
  %687 = vmatprep.mubr.f32.mxu0 0.0
  %688 = vmatmul.mubr.f32.gmra.mxu0 %v621
  %v689 = vpop.f32.mrf.mxu0
  %v690 = vadd.f32 0.0, %v689
  %v691 = vpop.f32.mrf.mxu0
  %v692 = vadd.f32 0.0, %v691
  %693 = vdwg.mxu0
  %v694 = vadd.f32 %v616, %v690
  %v695 = vadd.f32 %v617, %v692
  %v696 = vtanh.pop %v694
  %v697 = vtanh.pop %v695
  %v698 = vxor.u32 %v694, 2147483648
  %v699 = vxor.u32 %v695, 2147483648
  %v700 = vmul.f32 %v698, 1.442695
  %v701 = vpow.pop %v700
  %v702 = vmul.f32 %v699, 1.442695
  %v703 = vpow.pop %v702
  %v704 = vadd.f32 %v701, 1.0
  %v705 = vadd.f32 %v703, 1.0
  %v706 = vrcp.pop %v704
  %v707 = vmul.f32 1.0, %v706
  %v708 = vrcp.pop %v705
  %v709 = vmul.f32 1.0, %v708
  %v710 = vsel %vm375, %v696, %v707
  %v711 = vsel %vm376, %v697, %v709
  %v712 = vmul.f32 %v710, %v603
  %v713 = vmul.f32 %v710, %v711
  %715 = vrot.lane.b32.xlu0 %v713, 64
  %v716 = vpop.permute.xlu0 %715
  %v718 = vadd.f32 %v712, %v716
  %v719 = vtanh.pop %v718
  %v720 = vmul.f32 %v711, %v719
  %s721 = smul.u32 3, 2
  %s722 = smul.addr %s721, 8
  %s723 = scalar_lea.vmem [#allocation2], %s722
  %v724 = vld [vmem:[%s723] sm:$0xff]
  %v725 = vld [vmem:[%s723 + $0x8] sm:$0xff]
  %s726 = smul.u32 4, 2
  %s727 = smul.addr %s726, 8
  %s728 = scalar_lea.vmem [#allocation3], %s727
  %v729 = vld [vmem:[%s728] sm:$0xff]
  %v730 = vld [vmem:[%s728 + $0x8] sm:$0xff]
  %v731 = vadd.f32 %v724, %v729
  %v732 = vadd.f32 %v725, %v730
  %734 = vrot.lane.b32.xlu0 %v720, 64
  %v735 = vpop.permute.xlu0 %734
  %v736 = vsel %vm389, %v735, 0
  %738 = vmatprep.subr.mxu0 0.0
  %739 = vmatpush1.msra.mxu0 0.0
  %740 = vmatprep.subr.mxu0 0.0
  %741 = vmatpush1.msra.mxu0 0.0
  %742 = vmatprep.subr.mxu0 0.0
  %743 = vmatpush1.msra.mxu0 0.0
  %744 = vmatprep.subr.mxu0 0.0
  %745 = vmatpush1.msra.mxu0 0.0
  %746 = vmatprep.subr.mxu0 0.0
  %747 = vmatpush1.msra.mxu0 0.0
  %748 = vmatprep.subr.mxu0 0.0
  %749 = vmatpush1.msra.mxu0 0.0
  %750 = vmatprep.subr.mxu0 0.0
  %751 = vmatpush1.msra.mxu0 0.0
  %752 = vmatprep.subr.mxu0 0.0
  %753 = vmatpush1.msra.mxu0 0.0
  %754 = vmatprep.subr.mxu0 %v367
  %755 = vmatpush1.msra.mxu0 %v366
  %756 = vmatprep.subr.mxu0 %v365
  %757 = vmatpush1.msra.mxu0 %v364
  %758 = vmatprep.subr.mxu0 %v363
  %759 = vmatpush1.msra.mxu0 %v362
  %760 = vmatprep.subr.mxu0 %v361
  %761 = vmatpush1.msra.mxu0 %v360
  %762 = vmatprep.subr.mxu0 %v359
  %763 = vmatpush1.msra.mxu0 %v358
  %764 = vmatprep.subr.mxu0 %v357
  %765 = vmatpush1.msra.mxu0 %v356
  %766 = vmatprep.subr.mxu0 %v355
  %767 = vmatpush1.msra.mxu0 %v354
  %768 = vmatprep.subr.mxu0 %v353
  %769 = vmatpush1.msra.mxu0 %v352
  %770 = vmatprep.subr.mxu0 0.0
  %771 = vmatpush2.msra.mxu0 0.0
  %772 = vmatprep.subr.mxu0 0.0
  %773 = vmatpush2.msra.mxu0 0.0
  %774 = vmatprep.subr.mxu0 0.0
  %775 = vmatpush2.msra.mxu0 0.0
  %776 = vmatprep.subr.mxu0 0.0
  %777 = vmatpush2.msra.mxu0 0.0
  %778 = vmatprep.subr.mxu0 0.0
  %779 = vmatpush2.msra.mxu0 0.0
  %780 = vmatprep.subr.mxu0 0.0
  %781 = vmatpush2.msra.mxu0 0.0
  %782 = vmatprep.subr.mxu0 0.0
  %783 = vmatpush2.msra.mxu0 0.0
  %784 = vmatprep.subr.mxu0 0.0
  %785 = vmatpush2.msra.mxu0 0.0
  %786 = vmatprep.subr.mxu0 0.0
  %787 = vmatpush2.msra.mxu0 0.0
  %788 = vmatprep.subr.mxu0 0.0
  %789 = vmatpush2.msra.mxu0 0.0
  %790 = vmatprep.subr.mxu0 0.0
  %791 = vmatpush2.msra.mxu0 0.0
  %792 = vmatprep.subr.mxu0 0.0
  %793 = vmatpush2.msra.mxu0 0.0
  %794 = vmatprep.subr.mxu0 0.0
  %795 = vmatpush2.msra.mxu0 0.0
  %796 = vmatprep.subr.mxu0 0.0
  %797 = vmatpush2.msra.mxu0 0.0
  %798 = vmatprep.subr.mxu0 0.0
  %799 = vmatpush2.msra.mxu0 0.0
  %800 = vmatprep.subr.mxu0 0.0
  %801 = vmatpush2.msra.mxu0 0.0
  %802 = vmatprep.mubr.f32.mxu0 0.0
  %803 = vmatmul.mubr.f32.gmra.mxu0 %v736
  %v804 = vpop.f32.mrf.mxu0
  %v805 = vadd.f32 0.0, %v804
  %v806 = vpop.f32.mrf.mxu0
  %v807 = vadd.f32 0.0, %v806
  %808 = vdwg.mxu0
  %v809 = vadd.f32 %v731, %v805
  %v810 = vadd.f32 %v732, %v807
  %v811 = vtanh.pop %v809
  %v812 = vtanh.pop %v810
  %v813 = vxor.u32 %v809, 2147483648
  %v814 = vxor.u32 %v810, 2147483648
  %v815 = vmul.f32 %v813, 1.442695
  %v816 = vpow.pop %v815
  %v817 = vmul.f32 %v814, 1.442695
  %v818 = vpow.pop %v817
  %v819 = vadd.f32 %v816, 1.0
  %v820 = vadd.f32 %v818, 1.0
  %v821 = vrcp.pop %v819
  %v822 = vmul.f32 1.0, %v821
  %v823 = vrcp.pop %v820
  %v824 = vmul.f32 1.0, %v823
  %v825 = vsel %vm375, %v811, %v822
  %v826 = vsel %vm376, %v812, %v824
  %v827 = vmul.f32 %v825, %v718
  %v828 = vmul.f32 %v825, %v826
  %830 = vrot.lane.b32.xlu0 %v828, 64
  %v831 = vpop.permute.xlu0 %830
  %v833 = vadd.f32 %v827, %v831
  %v834 = vtanh.pop %v833
  %v835 = vmul.f32 %v826, %v834
  %s836 = smul.addr %s726, 8
  %s837 = scalar_lea.vmem [#allocation2], %s836
  %v838 = vld [vmem:[%s837] sm:$0xff]
  %v839 = vld [vmem:[%s837 + $0x8] sm:$0xff]
  %s840 = smul.addr %s721, 8
  %s841 = scalar_lea.vmem [#allocation3], %s840
  %v842 = vld [vmem:[%s841] sm:$0xff]
  %v843 = vld [vmem:[%s841 + $0x8] sm:$0xff]
  %v844 = vadd.f32 %v838, %v842
  %v845 = vadd.f32 %v839, %v843
  %847 = vrot.lane.b32.xlu0 %v835, 64
  %v848 = vpop.permute.xlu0 %847
  %v849 = vsel %vm389, %v848, 0
  %851 = vmatprep.subr.mxu0 0.0
  %852 = vmatpush1.msra.mxu0 0.0
  %853 = vmatprep.subr.mxu0 0.0
  %854 = vmatpush1.msra.mxu0 0.0
  %855 = vmatprep.subr.mxu0 0.0
  %856 = vmatpush1.msra.mxu0 0.0
  %857 = vmatprep.subr.mxu0 0.0
  %858 = vmatpush1.msra.mxu0 0.0
  %859 = vmatprep.subr.mxu0 0.0
  %860 = vmatpush1.msra.mxu0 0.0
  %861 = vmatprep.subr.mxu0 0.0
  %862 = vmatpush1.msra.mxu0 0.0
  %863 = vmatprep.subr.mxu0 0.0
  %864 = vmatpush1.msra.mxu0 0.0
  %865 = vmatprep.subr.mxu0 0.0
  %866 = vmatpush1.msra.mxu0 0.0
  %867 = vmatprep.subr.mxu0 %v367
  %868 = vmatpush1.msra.mxu0 %v366
  %869 = vmatprep.subr.mxu0 %v365
  %870 = vmatpush1.msra.mxu0 %v364
  %871 = vmatprep.subr.mxu0 %v363
  %872 = vmatpush1.msra.mxu0 %v362
  %873 = vmatprep.subr.mxu0 %v361
  %874 = vmatpush1.msra.mxu0 %v360
  %875 = vmatprep.subr.mxu0 %v359
  %876 = vmatpush1.msra.mxu0 %v358
  %877 = vmatprep.subr.mxu0 %v357
  %878 = vmatpush1.msra.mxu0 %v356
  %879 = vmatprep.subr.mxu0 %v355
  %880 = vmatpush1.msra.mxu0 %v354
  %881 = vmatprep.subr.mxu0 %v353
  %882 = vmatpush1.msra.mxu0 %v352
  %883 = vmatprep.subr.mxu0 0.0
  %884 = vmatpush2.msra.mxu0 0.0
  %885 = vmatprep.subr.mxu0 0.0
  %886 = vmatpush2.msra.mxu0 0.0
  %887 = vmatprep.subr.mxu0 0.0
  %888 = vmatpush2.msra.mxu0 0.0
  %889 = vmatprep.subr.mxu0 0.0
  %890 = vmatpush2.msra.mxu0 0.0
  %891 = vmatprep.subr.mxu0 0.0
  %892 = vmatpush2.msra.mxu0 0.0
  %893 = vmatprep.subr.mxu0 0.0
  %894 = vmatpush2.msra.mxu0 0.0
  %895 = vmatprep.subr.mxu0 0.0
  %896 = vmatpush2.msra.mxu0 0.0
  %897 = vmatprep.subr.mxu0 0.0
  %898 = vmatpush2.msra.mxu0 0.0
  %899 = vmatprep.subr.mxu0 0.0
  %900 = vmatpush2.msra.mxu0 0.0
  %901 = vmatprep.subr.mxu0 0.0
  %902 = vmatpush2.msra.mxu0 0.0
  %903 = vmatprep.subr.mxu0 0.0
  %904 = vmatpush2.msra.mxu0 0.0
  %905 = vmatprep.subr.mxu0 0.0
  %906 = vmatpush2.msra.mxu0 0.0
  %907 = vmatprep.subr.mxu0 0.0
  %908 = vmatpush2.msra.mxu0 0.0
  %909 = vmatprep.subr.mxu0 0.0
  %910 = vmatpush2.msra.mxu0 0.0
  %911 = vmatprep.subr.mxu0 0.0
  %912 = vmatpush2.msra.mxu0 0.0
  %913 = vmatprep.subr.mxu0 0.0
  %914 = vmatpush2.msra.mxu0 0.0
  %915 = vmatprep.mubr.f32.mxu0 0.0
  %916 = vmatmul.mubr.f32.gmra.mxu0 %v849
  %v917 = vpop.f32.mrf.mxu0
  %v918 = vadd.f32 0.0, %v917
  %v919 = vpop.f32.mrf.mxu0
  %v920 = vadd.f32 0.0, %v919
  %921 = vdwg.mxu0
  %v922 = vadd.f32 %v844, %v918
  %v923 = vadd.f32 %v845, %v920
  %v924 = vtanh.pop %v922
  %v925 = vtanh.pop %v923
  %v926 = vxor.u32 %v922, 2147483648
  %v927 = vxor.u32 %v923, 2147483648
  %v928 = vmul.f32 %v926, 1.442695
  %v929 = vpow.pop %v928
  %v930 = vmul.f32 %v927, 1.442695
  %v931 = vpow.pop %v930
  %v932 = vadd.f32 %v929, 1.0
  %v933 = vadd.f32 %v931, 1.0
  %v934 = vrcp.pop %v932
  %v935 = vmul.f32 1.0, %v934
  %v936 = vrcp.pop %v933
  %v937 = vmul.f32 1.0, %v936
  %v938 = vsel %vm375, %v924, %v935
  %v939 = vsel %vm376, %v925, %v937
  %v940 = vmul.f32 %v938, %v833
  %v941 = vmul.f32 %v938, %v939
  %943 = vrot.lane.b32.xlu0 %v941, 64
  %v944 = vpop.permute.xlu0 %943
  %v946 = vadd.f32 %v940, %v944
  %v947 = vtanh.pop %v946
  %v948 = vmul.f32 %v939, %v947
  %s949 = smul.addr %s611, 8
  %s950 = scalar_lea.vmem [#allocation2], %s949
  %v951 = vld [vmem:[%s950] sm:$0xff]
  %v952 = vld [vmem:[%s950 + $0x8] sm:$0xff]
  %s953 = smul.addr %s606, 8
  %s954 = scalar_lea.vmem [#allocation3], %s953
  %v955 = vld [vmem:[%s954] sm:$0xff]
  %v956 = vld [vmem:[%s954 + $0x8] sm:$0xff]
  %v957 = vadd.f32 %v951, %v955
  %v958 = vadd.f32 %v952, %v956
  %960 = vrot.lane.b32.xlu0 %v948, 64
  %v961 = vpop.permute.xlu0 %960
  %v962 = vsel %vm389, %v961, 0
  %964 = vmatprep.subr.mxu0 0.0
  %965 = vmatpush1.msra.mxu0 0.0
  %966 = vmatprep.subr.mxu0 0.0
  %967 = vmatpush1.msra.mxu0 0.0
  %968 = vmatprep.subr.mxu0 0.0
  %969 = vmatpush1.msra.mxu0 0.0
  %970 = vmatprep.subr.mxu0 0.0
  %971 = vmatpush1.msra.mxu0 0.0
  %972 = vmatprep.subr.mxu0 0.0
  %973 = vmatpush1.msra.mxu0 0.0
  %974 = vmatprep.subr.mxu0 0.0
  %975 = vmatpush1.msra.mxu0 0.0
  %976 = vmatprep.subr.mxu0 0.0
  %977 = vmatpush1.msra.mxu0 0.0
  %978 = vmatprep.subr.mxu0 0.0
  %979 = vmatpush1.msra.mxu0 0.0
  %980 = vmatprep.subr.mxu0 %v367
  %981 = vmatpush1.msra.mxu0 %v366
  %982 = vmatprep.subr.mxu0 %v365
  %983 = vmatpush1.msra.mxu0 %v364
  %984 = vmatprep.subr.mxu0 %v363
  %985 = vmatpush1.msra.mxu0 %v362
  %986 = vmatprep.subr.mxu0 %v361
  %987 = vmatpush1.msra.mxu0 %v360
  %988 = vmatprep.subr.mxu0 %v359
  %989 = vmatpush1.msra.mxu0 %v358
  %990 = vmatprep.subr.mxu0 %v357
  %991 = vmatpush1.msra.mxu0 %v356
  %992 = vmatprep.subr.mxu0 %v355
  %993 = vmatpush1.msra.mxu0 %v354
  %994 = vmatprep.subr.mxu0 %v353
  %995 = vmatpush1.msra.mxu0 %v352
  %996 = vmatprep.subr.mxu0 0.0
  %997 = vmatpush2.msra.mxu0 0.0
  %998 = vmatprep.subr.mxu0 0.0
  %999 = vmatpush2.msra.mxu0 0.0
  %1000 = vmatprep.subr.mxu0 0.0
  %1001 = vmatpush2.msra.mxu0 0.0
  %1002 = vmatprep.subr.mxu0 0.0
  %1003 = vmatpush2.msra.mxu0 0.0
  %1004 = vmatprep.subr.mxu0 0.0
  %1005 = vmatpush2.msra.mxu0 0.0
  %1006 = vmatprep.subr.mxu0 0.0
  %1007 = vmatpush2.msra.mxu0 0.0
  %1008 = vmatprep.subr.mxu0 0.0
  %1009 = vmatpush2.msra.mxu0 0.0
  %1010 = vmatprep.subr.mxu0 0.0
  %1011 = vmatpush2.msra.mxu0 0.0
  %1012 = vmatprep.subr.mxu0 0.0
  %1013 = vmatpush2.msra.mxu0 0.0
  %1014 = vmatprep.subr.mxu0 0.0
  %1015 = vmatpush2.msra.mxu0 0.0
  %1016 = vmatprep.subr.mxu0 0.0
  %1017 = vmatpush2.msra.mxu0 0.0
  %1018 = vmatprep.subr.mxu0 0.0
  %1019 = vmatpush2.msra.mxu0 0.0
  %1020 = vmatprep.subr.mxu0 0.0
  %1021 = vmatpush2.msra.mxu0 0.0
  %1022 = vmatprep.subr.mxu0 0.0
  %1023 = vmatpush2.msra.mxu0 0.0
  %1024 = vmatprep.subr.mxu0 0.0
  %1025 = vmatpush2.msra.mxu0 0.0
  %1026 = vmatprep.subr.mxu0 0.0
  %1027 = vmatpush2.msra.mxu0 0.0
  %1028 = vmatprep.mubr.f32.mxu0 0.0
  %1029 = vmatmul.mubr.f32.gmra.mxu0 %v962
  %v1030 = vpop.f32.mrf.mxu0
  %v1031 = vadd.f32 0.0, %v1030
  %v1032 = vpop.f32.mrf.mxu0
  %v1033 = vadd.f32 0.0, %v1032
  %1034 = vdwg.mxu0
  %v1035 = vadd.f32 %v957, %v1031
  %v1036 = vadd.f32 %v958, %v1033
  %v1037 = vtanh.pop %v1035
  %v1038 = vtanh.pop %v1036
  %v1039 = vxor.u32 %v1035, 2147483648
  %v1040 = vxor.u32 %v1036, 2147483648
  %v1041 = vmul.f32 %v1039, 1.442695
  %v1042 = vpow.pop %v1041
  %v1043 = vmul.f32 %v1040, 1.442695
  %v1044 = vpow.pop %v1043
  %v1045 = vadd.f32 %v1042, 1.0
  %v1046 = vadd.f32 %v1044, 1.0
  %v1047 = vrcp.pop %v1045
  %v1048 = vmul.f32 1.0, %v1047
  %v1049 = vrcp.pop %v1046
  %v1050 = vmul.f32 1.0, %v1049
  %v1051 = vsel %vm375, %v1037, %v1048
  %v1052 = vsel %vm376, %v1038, %v1050
  %v1053 = vmul.f32 %v1051, %v946
  %v1054 = vmul.f32 %v1051, %v1052
  %1056 = vrot.lane.b32.xlu0 %v1054, 64
  %v1057 = vpop.permute.xlu0 %1056
  %v1059 = vadd.f32 %v1053, %v1057
  %v1060 = vtanh.pop %v1059
  %v1061 = vmul.f32 %v1052, %v1060
  %s1062 = smul.addr %s496, 8
  %s1063 = scalar_lea.vmem [#allocation2], %s1062
  %v1064 = vld [vmem:[%s1063] sm:$0xff]
  %v1065 = vld [vmem:[%s1063 + $0x8] sm:$0xff]
  %s1066 = smul.addr %s491, 8
  %s1067 = scalar_lea.vmem [#allocation3], %s1066
  %v1068 = vld [vmem:[%s1067] sm:$0xff]
  %v1069 = vld [vmem:[%s1067 + $0x8] sm:$0xff]
  %v1070 = vadd.f32 %v1064, %v1068
  %v1071 = vadd.f32 %v1065, %v1069
  %1073 = vrot.lane.b32.xlu0 %v1061, 64
  %v1074 = vpop.permute.xlu0 %1073
  %v1075 = vsel %vm389, %v1074, 0
  %1077 = vmatprep.subr.mxu0 0.0
  %1078 = vmatpush1.msra.mxu0 0.0
  %1079 = vmatprep.subr.mxu0 0.0
  %1080 = vmatpush1.msra.mxu0 0.0
  %1081 = vmatprep.subr.mxu0 0.0
  %1082 = vmatpush1.msra.mxu0 0.0
  %1083 = vmatprep.subr.mxu0 0.0
  %1084 = vmatpush1.msra.mxu0 0.0
  %1085 = vmatprep.subr.mxu0 0.0
  %1086 = vmatpush1.msra.mxu0 0.0
  %1087 = vmatprep.subr.mxu0 0.0
  %1088 = vmatpush1.msra.mxu0 0.0
  %1089 = vmatprep.subr.mxu0 0.0
  %1090 = vmatpush1.msra.mxu0 0.0
  %1091 = vmatprep.subr.mxu0 0.0
  %1092 = vmatpush1.msra.mxu0 0.0
  %1093 = vmatprep.subr.mxu0 %v367
  %1094 = vmatpush1.msra.mxu0 %v366
  %1095 = vmatprep.subr.mxu0 %v365
  %1096 = vmatpush1.msra.mxu0 %v364
  %1097 = vmatprep.subr.mxu0 %v363
  %1098 = vmatpush1.msra.mxu0 %v362
  %1099 = vmatprep.subr.mxu0 %v361
  %1100 = vmatpush1.msra.mxu0 %v360
  %1101 = vmatprep.subr.mxu0 %v359
  %1102 = vmatpush1.msra.mxu0 %v358
  %1103 = vmatprep.subr.mxu0 %v357
  %1104 = vmatpush1.msra.mxu0 %v356
  %1105 = vmatprep.subr.mxu0 %v355
  %1106 = vmatpush1.msra.mxu0 %v354
  %1107 = vmatprep.subr.mxu0 %v353
  %1108 = vmatpush1.msra.mxu0 %v352
  %1109 = vmatprep.subr.mxu0 0.0
  %1110 = vmatpush2.msra.mxu0 0.0
  %1111 = vmatprep.subr.mxu0 0.0
  %1112 = vmatpush2.msra.mxu0 0.0
  %1113 = vmatprep.subr.mxu0 0.0
  %1114 = vmatpush2.msra.mxu0 0.0
  %1115 = vmatprep.subr.mxu0 0.0
  %1116 = vmatpush2.msra.mxu0 0.0
  %1117 = vmatprep.subr.mxu0 0.0
  %1118 = vmatpush2.msra.mxu0 0.0
  %1119 = vmatprep.subr.mxu0 0.0
  %1120 = vmatpush2.msra.mxu0 0.0
  %1121 = vmatprep.subr.mxu0 0.0
  %1122 = vmatpush2.msra.mxu0 0.0
  %1123 = vmatprep.subr.mxu0 0.0
  %1124 = vmatpush2.msra.mxu0 0.0
  %1125 = vmatprep.subr.mxu0 0.0
  %1126 = vmatpush2.msra.mxu0 0.0
  %1127 = vmatprep.subr.mxu0 0.0
  %1128 = vmatpush2.msra.mxu0 0.0
  %1129 = vmatprep.subr.mxu0 0.0
  %1130 = vmatpush2.msra.mxu0 0.0
  %1131 = vmatprep.subr.mxu0 0.0
  %1132 = vmatpush2.msra.mxu0 0.0
  %1133 = vmatprep.subr.mxu0 0.0
  %1134 = vmatpush2.msra.mxu0 0.0
  %1135 = vmatprep.subr.mxu0 0.0
  %1136 = vmatpush2.msra.mxu0 0.0
  %1137 = vmatprep.subr.mxu0 0.0
  %1138 = vmatpush2.msra.mxu0 0.0
  %1139 = vmatprep.subr.mxu0 0.0
  %1140 = vmatpush2.msra.mxu0 0.0
  %1141 = vmatprep.mubr.f32.mxu0 0.0
  %1142 = vmatmul.mubr.f32.gmra.mxu0 %v1075
  %v1143 = vpop.f32.mrf.mxu0
  %v1144 = vadd.f32 0.0, %v1143
  %v1145 = vpop.f32.mrf.mxu0
  %v1146 = vadd.f32 0.0, %v1145
  %1147 = vdwg.mxu0
  %v1148 = vadd.f32 %v1070, %v1144
  %v1149 = vadd.f32 %v1071, %v1146
  %v1150 = vtanh.pop %v1148
  %v1151 = vtanh.pop %v1149
  %v1152 = vxor.u32 %v1148, 2147483648
  %v1153 = vxor.u32 %v1149, 2147483648
  %v1154 = vmul.f32 %v1152, 1.442695
  %v1155 = vpow.pop %v1154
  %v1156 = vmul.f32 %v1153, 1.442695
  %v1157 = vpow.pop %v1156
  %v1158 = vadd.f32 %v1155, 1.0
  %v1159 = vadd.f32 %v1157, 1.0
  %v1160 = vrcp.pop %v1158
  %v1161 = vmul.f32 1.0, %v1160
  %v1162 = vrcp.pop %v1159
  %v1163 = vmul.f32 1.0, %v1162
  %v1164 = vsel %vm375, %v1150, %v1161
  %v1165 = vsel %vm376, %v1151, %v1163
  %v1166 = vmul.f32 %v1164, %v1059
  %v1167 = vmul.f32 %v1164, %v1165
  %1169 = vrot.lane.b32.xlu0 %v1167, 64
  %v1170 = vpop.permute.xlu0 %1169
  %v1172 = vadd.f32 %v1166, %v1170
  %v1173 = vtanh.pop %v1172
  %v1174 = vmul.f32 %v1165, %v1173
  %s1175 = smul.addr %s382, 8
  %s1176 = scalar_lea.vmem [#allocation2], %s1175
  %v1177 = vld [vmem:[%s1176] sm:$0xff]
  %v1178 = vld [vmem:[%s1176 + $0x8] sm:$0xff]
  %s1179 = smul.addr %s377, 8
  %s1180 = scalar_lea.vmem [#allocation3], %s1179
  %v1181 = vld [vmem:[%s1180] sm:$0xff]
  %v1182 = vld [vmem:[%s1180 + $0x8] sm:$0xff]
  %v1183 = vadd.f32 %v1177, %v1181
  %v1184 = vadd.f32 %v1178, %v1182
  %1186 = vrot.lane.b32.xlu0 %v1174, 64
  %v1187 = vpop.permute.xlu0 %1186
  %v1188 = vsel %vm389, %v1187, 0
  %1190 = vmatprep.subr.mxu0 0.0
  %1191 = vmatpush1.msra.mxu0 0.0
  %1192 = vmatprep.subr.mxu0 0.0
  %1193 = vmatpush1.msra.mxu0 0.0
  %1194 = vmatprep.subr.mxu0 0.0
  %1195 = vmatpush1.msra.mxu0 0.0
  %1196 = vmatprep.subr.mxu0 0.0
  %1197 = vmatpush1.msra.mxu0 0.0
  %1198 = vmatprep.subr.mxu0 0.0
  %1199 = vmatpush1.msra.mxu0 0.0
  %1200 = vmatprep.subr.mxu0 0.0
  %1201 = vmatpush1.msra.mxu0 0.0
  %1202 = vmatprep.subr.mxu0 0.0
  %1203 = vmatpush1.msra.mxu0 0.0
  %1204 = vmatprep.subr.mxu0 0.0
  %1205 = vmatpush1.msra.mxu0 0.0
  %1206 = vmatprep.subr.mxu0 %v367
  %1207 = vmatpush1.msra.mxu0 %v366
  %1208 = vmatprep.subr.mxu0 %v365
  %1209 = vmatpush1.msra.mxu0 %v364
  %1210 = vmatprep.subr.mxu0 %v363
  %1211 = vmatpush1.msra.mxu0 %v362
  %1212 = vmatprep.subr.mxu0 %v361
  %1213 = vmatpush1.msra.mxu0 %v360
  %1214 = vmatprep.subr.mxu0 %v359
  %1215 = vmatpush1.msra.mxu0 %v358
  %1216 = vmatprep.subr.mxu0 %v357
  %1217 = vmatpush1.msra.mxu0 %v356
  %1218 = vmatprep.subr.mxu0 %v355
  %1219 = vmatpush1.msra.mxu0 %v354
  %1220 = vmatprep.subr.mxu0 %v353
  %1221 = vmatpush1.msra.mxu0 %v352
  %1222 = vmatprep.subr.mxu0 0.0
  %1223 = vmatpush2.msra.mxu0 0.0
  %1224 = vmatprep.subr.mxu0 0.0
  %1225 = vmatpush2.msra.mxu0 0.0
  %1226 = vmatprep.subr.mxu0 0.0
  %1227 = vmatpush2.msra.mxu0 0.0
  %1228 = vmatprep.subr.mxu0 0.0
  %1229 = vmatpush2.msra.mxu0 0.0
  %1230 = vmatprep.subr.mxu0 0.0
  %1231 = vmatpush2.msra.mxu0 0.0
  %1232 = vmatprep.subr.mxu0 0.0
  %1233 = vmatpush2.msra.mxu0 0.0
  %1234 = vmatprep.subr.mxu0 0.0
  %1235 = vmatpush2.msra.mxu0 0.0
  %1236 = vmatprep.subr.mxu0 0.0
  %1237 = vmatpush2.msra.mxu0 0.0
  %1238 = vmatprep.subr.mxu0 0.0
  %1239 = vmatpush2.msra.mxu0 0.0
  %1240 = vmatprep.subr.mxu0 0.0
  %1241 = vmatpush2.msra.mxu0 0.0
  %1242 = vmatprep.subr.mxu0 0.0
  %1243 = vmatpush2.msra.mxu0 0.0
  %1244 = vmatprep.subr.mxu0 0.0
  %1245 = vmatpush2.msra.mxu0 0.0
  %1246 = vmatprep.subr.mxu0 0.0
  %1247 = vmatpush2.msra.mxu0 0.0
  %1248 = vmatprep.subr.mxu0 0.0
  %1249 = vmatpush2.msra.mxu0 0.0
  %1250 = vmatprep.subr.mxu0 0.0
  %1251 = vmatpush2.msra.mxu0 0.0
  %1252 = vmatprep.subr.mxu0 0.0
  %1253 = vmatpush2.msra.mxu0 0.0
  %1254 = vmatprep.mubr.f32.mxu0 0.0
  %1255 = vmatmul.mubr.f32.gmra.mxu0 %v1188
  %v1256 = vpop.f32.mrf.mxu0
  %v1257 = vadd.f32 0.0, %v1256
  %v1258 = vpop.f32.mrf.mxu0
  %v1259 = vadd.f32 0.0, %v1258
  %1260 = vdwg.mxu0
  %v1261 = vadd.f32 %v1183, %v1257
  %v1262 = vadd.f32 %v1184, %v1259
  %v1263 = vtanh.pop %v1261
  %v1264 = vtanh.pop %v1262
  %v1265 = vxor.u32 %v1261, 2147483648
  %v1266 = vxor.u32 %v1262, 2147483648
  %v1267 = vmul.f32 %v1265, 1.442695
  %v1268 = vpow.pop %v1267
  %v1269 = vmul.f32 %v1266, 1.442695
  %v1270 = vpow.pop %v1269
  %v1271 = vadd.f32 %v1268, 1.0
  %v1272 = vadd.f32 %v1270, 1.0
  %v1273 = vrcp.pop %v1271
  %v1274 = vmul.f32 1.0, %v1273
  %v1275 = vrcp.pop %v1272
  %v1276 = vmul.f32 1.0, %v1275
  %v1277 = vsel %vm375, %v1263, %v1274
  %v1278 = vsel %vm376, %v1264, %v1276
  %v1279 = vmul.f32 %v1277, %v1172
  %v1280 = vmul.f32 %v1277, %v1278
  %1282 = vrot.lane.b32.xlu0 %v1280, 64
  %v1283 = vpop.permute.xlu0 %1282
  %v1285 = vadd.f32 %v1279, %v1283
  %v1286 = vtanh.pop %v1285
  %v1287 = vmul.f32 %v1278, %v1286
  %v1288 = vld [vmem:[%s5] sm:$0xff]
  %v1289 = vld [vmem:[%s5 + $0x8] sm:$0xff]
  %v1290 = vld [vmem:[%s5 + $0x10] sm:$0xff]
  %v1291 = vld [vmem:[%s5 + $0x18] sm:$0xff]
  %v1292 = vld [vmem:[%s5 + $0x20] sm:$0xff]
  %v1293 = vld [vmem:[%s5 + $0x28] sm:$0xff]
  %v1294 = vld [vmem:[%s5 + $0x30] sm:$0xff]
  %v1295 = vld [vmem:[%s5 + $0x38] sm:$0xff]
  %v1296 = vld [vmem:[%s6] sm:$0x1]
  %v1298 = vlaneseq
  %v1299 = vshrl.u32 %v1298, 7
  %v1300 = vsub.s32 0, %v1299
  %v1301 = vrot.slane %v1296, %v1300
  %1304 = vrot.lane.b32.xlu0 %v1287, 64
  %v1305 = vpop.permute.xlu0 %1304
  %v1306 = vsel %vm389, %v1305, 0
  %1308 = vmatprep.subr.mxu0 0.0
  %1309 = vmatpush1.msra.mxu0 0.0
  %1310 = vmatprep.subr.mxu0 0.0
  %1311 = vmatpush1.msra.mxu0 0.0
  %1312 = vmatprep.subr.mxu0 0.0
  %1313 = vmatpush1.msra.mxu0 0.0
  %1314 = vmatprep.subr.mxu0 0.0
  %1315 = vmatpush1.msra.mxu0 0.0
  %1316 = vmatprep.subr.mxu0 0.0
  %1317 = vmatpush1.msra.mxu0 0.0
  %1318 = vmatprep.subr.mxu0 0.0
  %1319 = vmatpush1.msra.mxu0 0.0
  %1320 = vmatprep.subr.mxu0 0.0
  %1321 = vmatpush1.msra.mxu0 0.0
  %1322 = vmatprep.subr.mxu0 0.0
  %1323 = vmatpush1.msra.mxu0 0.0
  %1324 = vmatprep.subr.mxu0 0.0
  %1325 = vmatpush1.msra.mxu0 %v1295
  %1326 = vmatprep.subr.mxu0 0.0
  %1327 = vmatpush1.msra.mxu0 %v1294
  %1328 = vmatprep.subr.mxu0 0.0
  %1329 = vmatpush1.msra.mxu0 %v1293
  %1330 = vmatprep.subr.mxu0 0.0
  %1331 = vmatpush1.msra.mxu0 %v1292
  %1332 = vmatprep.subr.mxu0 0.0
  %1333 = vmatpush1.msra.mxu0 %v1291
  %1334 = vmatprep.subr.mxu0 0.0
  %1335 = vmatpush1.msra.mxu0 %v1290
  %1336 = vmatprep.subr.mxu0 0.0
  %1337 = vmatpush1.msra.mxu0 %v1289
  %1338 = vmatprep.subr.mxu0 0.0
  %1339 = vmatpush1.msra.mxu0 %v1288
  %1340 = vmatprep.subr.mxu0 0.0
  %1341 = vmatpush2.msra.mxu0 0.0
  %1342 = vmatprep.subr.mxu0 0.0
  %1343 = vmatpush2.msra.mxu0 0.0
  %1344 = vmatprep.subr.mxu0 0.0
  %1345 = vmatpush2.msra.mxu0 0.0
  %1346 = vmatprep.subr.mxu0 0.0
  %1347 = vmatpush2.msra.mxu0 0.0
  %1348 = vmatprep.subr.mxu0 0.0
  %1349 = vmatpush2.msra.mxu0 0.0
  %1350 = vmatprep.subr.mxu0 0.0
  %1351 = vmatpush2.msra.mxu0 0.0
  %1352 = vmatprep.subr.mxu0 0.0
  %1353 = vmatpush2.msra.mxu0 0.0
  %1354 = vmatprep.subr.mxu0 0.0
  %1355 = vmatpush2.msra.mxu0 0.0
  %1356 = vmatprep.subr.mxu0 0.0
  %1357 = vmatpush2.msra.mxu0 0.0
  %1358 = vmatprep.subr.mxu0 0.0
  %1359 = vmatpush2.msra.mxu0 0.0
  %1360 = vmatprep.subr.mxu0 0.0
  %1361 = vmatpush2.msra.mxu0 0.0
  %1362 = vmatprep.subr.mxu0 0.0
  %1363 = vmatpush2.msra.mxu0 0.0
  %1364 = vmatprep.subr.mxu0 0.0
  %1365 = vmatpush2.msra.mxu0 0.0
  %1366 = vmatprep.subr.mxu0 0.0
  %1367 = vmatpush2.msra.mxu0 0.0
  %1368 = vmatprep.subr.mxu0 0.0
  %1369 = vmatpush2.msra.mxu0 0.0
  %1370 = vmatprep.subr.mxu0 0.0
  %1371 = vmatpush2.msra.mxu0 0.0
  %1372 = vmatprep.mubr.f32.mxu0 0.0
  %1373 = vmatmul.mubr.f32.gmra.mxu0 %v1306
  %v1374 = vpop.f32.mrf.mxu0
  %v1375 = vadd.f32 %v1301, %v1374
  %v1376 = vpop.f32.mrf.mxu0
  %1377 = vdwg.mxu0
  %v1378 = vmul.f32 %v1375, 0.5
  %v1379 = vmul.f32 %v1378, 1.442695
  %v1380 = vpow.pop %v1379
  %v1381 = vld [vmem:[%s7] sm:$0xff]
  %1383 = vrot.lane.b32.xlu0 %v1381, 8
  %v1384 = vpop.permute.xlu0 %1383
  %v1386 = vmul.f32 %v1380, %v1384
  %1388 = vrot.lane.b32.xlu0 %v1386, 120
  %v1389 = vpop.permute.xlu0 %1388
  %v1391 = vadd.f32 %v1375, %v1389
  %vm1392 = vcmask 64512
  %1393 = vst.msk [vmem:[%s8] sm:$0xff] %vm1392, %v1391
  %1394 = vst.msk [vmem:[%s9] sm:$0xff] %vm1392, %v1375
  %1396 = vrot.lane.b32.xlu0 %v1375, 120
  %v1397 = vpop.permute.xlu0 %1396
  %1399 = vst.msk [vmem:[%s10] sm:$0xff] %vm1392, %v1397
  // Predicated region
  $region34: #{encoder_rnn_forward.1} parent=0 // pred_check
    _
  $region35: #{encoder_rnn_forward.1} parent=0 // pred_check_branch
    %1401 = sbr.rel (0) target = $region37
  $region36: #{encoder_rnn_forward.1} parent=0 // pred_region
    _
  $region37: #{encoder_rnn_forward.1} parent=0 // pred_fallthru
    _
  // Predicated region
  $region38: #{encoder_rnn_forward.1} parent=0 // pred_check
    _
  $region39: #{encoder_rnn_forward.1} parent=0 // pred_check_branch
    %1403 = sbr.rel (0) target = $region41
  $region40: #{encoder_rnn_forward.1} parent=0 // pred_region
    _
  $region41: #{encoder_rnn_forward.1} parent=0 // pred_fallthru
    _
  // Predicated region
  $region42: #{encoder_rnn_forward.1} parent=0 // pred_check
    _
  $region43: #{encoder_rnn_forward.1} parent=0 // pred_check_branch
    %1405 = sbr.rel (0) target = $region45
  $region44: #{encoder_rnn_forward.1} parent=0 // pred_region
    _
  $region45: #{encoder_rnn_forward.1} parent=0 // pred_fallthru
    _
  // Predicated region
  $region46: #{encoder_rnn_forward.1} parent=0 // pred_check
    _
  $region47: #{encoder_rnn_forward.1} parent=0 // pred_check_branch
    %1407 = sbr.rel (0) target = $region49
  $region48: #{encoder_rnn_forward.1} parent=0 // pred_region
    _
  $region49: #{encoder_rnn_forward.1} parent=0 // pred_fallthru
    _
  // Predicated region
  $region50: #{encoder_rnn_forward.1} parent=0 // pred_check
    _
  $region51: #{encoder_rnn_forward.1} parent=0 // pred_check_branch
    %1409 = sbr.rel (0) target = $region53
  $region52: #{encoder_rnn_forward.1} parent=0 // pred_region
    _
  $region53: #{encoder_rnn_forward.1} parent=0 // pred_fallthru
    _
  // Predicated region
  $region54: #{encoder_rnn_forward.1} parent=0 // pred_check
    _
  $region55: #{encoder_rnn_forward.1} parent=0 // pred_check_branch
    %1411 = sbr.rel (0) target = $region57
  $region56: #{encoder_rnn_forward.1} parent=0 // pred_region
    _
  $region57: #{encoder_rnn_forward.1} parent=0 // pred_fallthru
    _

</llo_original>
